<compile_context>
chip_gen: v6e
topology: v6e:2x2x1
jax: 0.10.0
libtpu: 0.0.40
codegen_flags: <defaults>
</compile_context>

<pallas_src>
import math
import functools

import jax
import jax.numpy as jnp
from jax.experimental import pallas as pl
from jax.experimental.pallas import tpu as pltpu


# ----------------------------------------------------------------------------
# In-kernel math helpers
# ----------------------------------------------------------------------------
def _erf_approx(x):
    # Abramowitz & Stegun 7.1.26, |err| < 1.5e-7 (f32-accurate); avoids relying on an
    # erf lowering inside Mosaic.
    a1, a2, a3, a4, a5 = 0.254829592, -0.284496736, 1.421413741, -1.453152027, 1.061405429
    p = 0.3275911
    ax = jnp.abs(x)
    t = pl.reciprocal(1.0 + p * ax, approx=True)          # EUP, off the VALU
    poly = ((((a5 * t + a4) * t + a3) * t + a2) * t + a1) * t
    y = 1.0 - poly * jnp.exp(-ax * ax)
    return jnp.where(x >= 0, y, -y)


def _gelu_exact(x):
    # torch.nn.GELU() default = exact (erf) formulation
    return 0.5 * x * (1.0 + _erf_approx(x * (1.0 / math.sqrt(2.0))))


def _layernorm(x, w_ref, b_ref, eps=1e-5):
    mu = jnp.mean(x, axis=-1, keepdims=True)
    var = jnp.mean((x - mu) * (x - mu), axis=-1, keepdims=True)
    return (x - mu) * jax.lax.rsqrt(var + eps) * w_ref[...] + b_ref[...]


# ----------------------------------------------------------------------------
# Fused transformer kernel: grid = (batch, layer)
# ----------------------------------------------------------------------------
def transformer_kernel(
    x_ref,                    # (N, Cin) input slab for this batch element
    pw, pb,                   # input projection (bf16 / f32), or (1,1) dummies
    ln1w, ln1b,               # ln_1
    nrmw, nrmb,               # attn.norm
    wq, wkv, wo,              # attention projections (pre-transposed (in,out), bf16)
    olnw, olnb,               # attn.to_out LayerNorm
    ln2w, ln2b,               # ln_2
    wfc, bfc, wproj, bproj,   # MLP (weights bf16, biases f32)
    o_ref,                    # (N, D) output slab
    xs_ref,                   # VMEM scratch: running activation (N, D) f32
    *, heads, dim_head, causal, has_proj,
):
    f32 = jnp.float32
    bf16 = jnp.bfloat16
    l = pl.program_id(1)

    # ---- layer 0: project the raw input into the scratch-resident activation ------
    @pl.when(l == 0)
    def _():
        if has_proj:
            xin = x_ref[...].astype(bf16)
            xs_ref[...] = jnp.dot(xin, pw[...], preferred_element_type=f32) + pb[...]
        else:
            xs_ref[...] = x_ref[...].astype(f32)

    x = xs_ref[...]                                # (N, D) f32
    n = x.shape[0]

    # ---- attention branch ----------------------------------------------------------
    h = _layernorm(x, ln1w, ln1b)                  # ln_1 (f32)
    hn = _layernorm(h, nrmw, nrmb)                 # attn.norm (f32)
    hn_b = hn.astype(bf16)

    q = jnp.dot(hn_b, wq[...], preferred_element_type=f32)    # (N, heads*dh)
    kv = jnp.dot(hn_b, wkv[...], preferred_element_type=f32)  # (N, 2*dh)
    k = kv[:, :dim_head]                                       # shared single K head
    v = kv[:, dim_head:]                                        # shared single V head

    scale = dim_head ** (-0.5)
    q = q * (scale * math.sqrt(scale))
    k = k * math.sqrt(scale)

    # Fuse heads: stack per-head query slices along sublanes (head-major rows):
    # one (heads*N, dh)x(dh, N) score matmul, one softmax, one PV matmul.
    qs = jnp.concatenate(
        [q[:, hh * dim_head:(hh + 1) * dim_head] for hh in range(heads)], axis=0
    ).astype(bf16)                                              # (heads*N, dh)
    sim = jax.lax.dot_general(                                  # (heads*N, N), f32
        qs, k.astype(bf16), (((1,), (1,)), ((), ())), preferred_element_type=f32)

    if causal:
        neg = -jnp.finfo(f32).max
        qpos1 = jax.lax.broadcasted_iota(jnp.int32, (n, 1), 0)
        qpos = jnp.concatenate([qpos1] * heads, axis=0)          # (heads*N, 1)
        kpos = jax.lax.broadcasted_iota(jnp.int32, (heads * n, n), 1)
        sim = jnp.where(kpos > qpos, neg, sim)

    m = jnp.max(sim, axis=-1, keepdims=True)
    e = jnp.exp(sim - m)
    attn = e * pl.reciprocal(jnp.sum(e, axis=-1, keepdims=True), approx=True)

    pv = jnp.dot(attn.astype(bf16), v.astype(bf16),
                 preferred_element_type=f32)                     # (heads*N, dh)
    # un-stack heads back onto the lane axis: (N, heads*dh)
    out = jnp.concatenate(
        [pv[hh * n:(hh + 1) * n, :] for hh in range(heads)], axis=1)

    ao = jnp.dot(out.astype(bf16), wo[...], preferred_element_type=f32)   # (N, D)
    ao = _layernorm(ao, olnw, olnb)                              # to_out LayerNorm
    x1 = x + ao

    # ---- MLP branch ------------------------------------------------------------------
    h2 = _layernorm(x1, ln2w, ln2b)
    u = jnp.dot(h2.astype(bf16), wfc[...], preferred_element_type=f32) + bfc[...]
    u = _gelu_exact(u)
    ff = jnp.dot(u.astype(bf16), wproj[...], preferred_element_type=f32) + bproj[...]

    xs_ref[...] = x1 + ff

    # ---- final layer: flush the resident activation to the output slab ---------------
    @pl.when(l == pl.num_programs(1) - 1)
    def _():
        o_ref[...] = xs_ref[...].astype(o_ref.dtype)


# ----------------------------------------------------------------------------
# Wrapper (glue): stack per-layer params, build specs, launch one pallas_call
# ----------------------------------------------------------------------------
def _vmem_limit(N, C, D, heads, layer_w_bytes):
    f32 = 4
    act = N * D * f32
    sim = heads * N * N * f32
    mlp = N * 4 * D * f32
    est = (
        2 * N * C * f32 + 2 * act   # x in + out slabs (double-buffered)
        + 2 * layer_w_bytes         # per-layer weight blocks (double-buffered)
        + 16 * act                  # LN temps, residuals, q/out, bf16 copies
        + 4 * sim                   # sim / exp / attn (+ bf16 copy)
        + 4 * mlp                   # MLP intermediate f32 + bf16 + gelu
        + act                       # scratch
    )
    # never below the compiler default, never above v7x's 64 MiB physical VMEM
    return int(min(max(2 * est, 32 << 20), 64 << 20))


def transformer_pallas(x, params, *, heads, dim_head, causal):
    B, N, C = x.shape
    D = heads * dim_head
    L = len(params["blocks"])
    has_proj = (D != C)
    bf16 = jnp.bfloat16

    def vecf(v):
        return v.reshape(1, -1).astype(jnp.float32)

    def wt(w):
        return w.T.astype(bf16)

    def stack(name, transform):
        return jnp.stack([transform(blk[name]) for blk in params["blocks"]], axis=0)

    if has_proj:
        pw = params["proj_w"].T.astype(bf16)                        # (C, D)
        pb = params["proj_b"].reshape(1, -1).astype(jnp.float32)    # (1, D)
    else:
        pw = jnp.zeros((1, 1), bf16)                                # unused dummies
        pb = jnp.zeros((1, 1), jnp.float32)

    # MXU operands (weights) pre-transposed to (in, out) and bf16; LN gains/biases and
    # Linear biases stay f32. Each is stacked along a leading layer axis.
    args = [
        pw, pb,
        stack("ln1_w", vecf), stack("ln1_b", vecf),
        stack("nrm_w", vecf), stack("nrm_b", vecf),
        stack("wq", wt), stack("wkv", wt), stack("wo", wt),
        stack("oln_w", vecf), stack("oln_b", vecf),
        stack("ln2_w", vecf), stack("ln2_b", vecf),
        stack("wfc", wt), stack("bfc", vecf),
        stack("wproj", wt), stack("bproj", vecf),
    ]

    in_specs = [pl.BlockSpec((None, N, C), lambda b, l: (b, 0, 0))]   # x: fetched once per b
    in_specs += [
        pl.BlockSpec(pw.shape, lambda b, l: (0, 0)),                  # layer-invariant
        pl.BlockSpec(pb.shape, lambda b, l: (0, 0)),
    ]
    for a in args[2:]:                                                # stacked per-layer params
        in_specs.append(pl.BlockSpec((None,) + a.shape[1:], lambda b, l: (l, 0, 0)))

    layer_w_bytes = sum(
        int(a.size) * a.dtype.itemsize // max(a.shape[0], 1) for a in args[2:]
    )

    kernel = functools.partial(
        transformer_kernel,
        heads=heads, dim_head=dim_head, causal=causal, has_proj=has_proj)

    return pl.pallas_call(
        kernel,
        out_shape=jax.ShapeDtypeStruct((B, N, D), x.dtype),
        grid=(B, L),
        in_specs=in_specs,
        out_specs=pl.BlockSpec((None, N, D), lambda b, l: (b, 0, 0)),
        scratch_shapes=[pltpu.VMEM((N, D), jnp.float32)],
        compiler_params=pltpu.CompilerParams(
            # batch is independent -> both TensorCores on v7x; layers are sequential
            dimension_semantics=("parallel", "arbitrary"),
            vmem_limit_bytes=_vmem_limit(N, C, D, heads, layer_w_bytes),
        ),
    )(x, *args)


# ----------------------------------------------------------------------------
# Deterministic parameter init (synthetic; mirrors the torch module's shapes)
# ----------------------------------------------------------------------------
def init_params(key, context_size, layers, dim_head, heads):
    width = dim_head * heads
    inner = dim_head * heads
    n_keys = 2 + layers * 16
    keys = list(jax.random.split(key, n_keys))
    ki = iter(keys)

    def rnd(shape, scale=0.02):
        return (scale * jax.random.normal(next(ki), shape)).astype(jnp.float32)

    params = {
        "proj_w": rnd((width, context_size)),
        "proj_b": rnd((width,)),
        "blocks": [],
    }
    for _ in range(layers):
        blk = {
            "ln1_w": 1.0 + rnd((width,), 0.05), "ln1_b": rnd((width,), 0.05),
            "nrm_w": 1.0 + rnd((width,), 0.05), "nrm_b": rnd((width,), 0.05),
            "wq": rnd((inner, width)),
            "wkv": rnd((2 * dim_head, width)),
            "wo": rnd((width, inner)),
            "oln_w": 1.0 + rnd((width,), 0.05), "oln_b": rnd((width,), 0.05),
            "ln2_w": 1.0 + rnd((width,), 0.05), "ln2_b": rnd((width,), 0.05),
            "wfc": rnd((4 * width, width)), "bfc": rnd((4 * width,)),
            "wproj": rnd((width, 4 * width)), "bproj": rnd((width,)),
        }
        params["blocks"].append(blk)
    return params


# ----------------------------------------------------------------------------
# Pure-JAX reference (faithful transcription of the torch forward, using the same
# mixed-precision policy as the kernel: bf16 matmul operands, f32 accumulation,
# f32 LayerNorm / softmax / GELU).
# ----------------------------------------------------------------------------
def _ref_ln(x, w, b, eps=1e-5):
    mu = x.mean(-1, keepdims=True)
    var = ((x - mu) ** 2).mean(-1, keepdims=True)
    return (x - mu) / jnp.sqrt(var + eps) * w + b


def _ref_mm(a, b):
    return jnp.dot(a.astype(jnp.bfloat16), b.astype(jnp.bfloat16),
                   preferred_element_type=jnp.float32)


def _ref_block(x, p, heads, dh, causal):
    B, N, D = x.shape
    h = _ref_ln(x, p["ln1_w"], p["ln1_b"])
    hn = _ref_ln(h, p["nrm_w"], p["nrm_b"])
    q = _ref_mm(hn, p["wq"].T)
    kv = _ref_mm(hn, p["wkv"].T)
    k, v = kv[..., :dh], kv[..., dh:]
    q = q.reshape(B, N, heads, dh).transpose(0, 2, 1, 3)
    scale = dh ** (-0.5)
    q = q * scale * math.sqrt(scale)
    k = k * math.sqrt(scale)
    sim = jnp.einsum("bhid,bjd->bhij", q.astype(jnp.bfloat16), k.astype(jnp.bfloat16),
                     preferred_element_type=jnp.float32)
    if causal:
        cm = jnp.triu(jnp.ones((N, N), bool), 1)
        sim = jnp.where(cm, -jnp.finfo(jnp.float32).max, sim)
    attn = jax.nn.softmax(sim, axis=-1)
    out = jnp.einsum("bhij,bjd->bhid", attn.astype(jnp.bfloat16), v.astype(jnp.bfloat16),
                     preferred_element_type=jnp.float32)
    out = out.transpose(0, 2, 1, 3).reshape(B, N, heads * dh)
    ao = _ref_ln(_ref_mm(out, p["wo"].T), p["oln_w"], p["oln_b"])
    x1 = x + ao
    h2 = _ref_ln(x1, p["ln2_w"], p["ln2_b"])
    ff = jax.nn.gelu(_ref_mm(h2, p["wfc"].T) + p["bfc"], approximate=False)
    ff = _ref_mm(ff, p["wproj"].T) + p["bproj"]
    return x1 + ff


def transformer_ref(x, params, *, heads, dim_head, causal):
    width = heads * dim_head
    if width != x.shape[-1]:
        x = _ref_mm(x, params["proj_w"].T) + params["proj_b"]
    for p in params["blocks"]:
        x = _ref_block(x, p, heads, dim_head, causal)
    return x


# TODO(synk): the optional key-padding `mask` argument of CausalMultiHeadAttention is not
# implemented (Transformer.forward always calls attention with mask=None); dropout p=0.0
# is an identity at inference and is omitted.

# ----------------------------------------------------------------------------
if __name__ == "__main__":
    B, N = 2, 8
    context_size = 16
    layers = 2
    attention_channels = 8   # dim_head
    attention_heads = 4      # heads -> width = 32
    is_causal = True

    key = jax.random.PRNGKey(0)
    kx, kp = jax.random.split(key)
    x = jax.random.normal(kx, (B, N, context_size), dtype=jnp.float32)
    params = init_params(kp, context_size, layers, attention_channels, attention_heads)

    out = transformer_pallas(
        x, params, heads=attention_heads, dim_head=attention_channels, causal=is_causal)
    out = jax.block_until_ready(out)

    ref = transformer_ref(
        x, params, heads=attention_heads, dim_head=attention_channels, causal=is_causal)
    ref = jax.block_until_ready(ref)

    assert out.shape == (B, N, attention_channels * attention_heads)
    # Tolerance covers the approx EUP reciprocal + A&S erf used in-kernel; matmul
    # precision (bf16 operands, f32 accumulation) is matched in the reference.
    assert jnp.allclose(out, ref, rtol=2e-2, atol=2e-2), (
        float(jnp.max(jnp.abs(out - ref))))

    print("KERNEL_OK")
</pallas_src>

<mosaic_0001>
module attributes {stable_mosaic.version = 11 : i64} {
  func.func @transformer_kernel(%arg0: i32, %arg1: i32, %arg2: memref<1x8x16xf32, #tpu.memory_space<vmem>>, %arg3: memref<16x32xbf16, #tpu.memory_space<vmem>>, %arg4: memref<1x32xf32, #tpu.memory_space<vmem>>, %arg5: memref<1x1x32xf32, #tpu.memory_space<vmem>>, %arg6: memref<1x1x32xf32, #tpu.memory_space<vmem>>, %arg7: memref<1x1x32xf32, #tpu.memory_space<vmem>>, %arg8: memref<1x1x32xf32, #tpu.memory_space<vmem>>, %arg9: memref<1x32x32xbf16, #tpu.memory_space<vmem>>, %arg10: memref<1x32x16xbf16, #tpu.memory_space<vmem>>, %arg11: memref<1x32x32xbf16, #tpu.memory_space<vmem>>, %arg12: memref<1x1x32xf32, #tpu.memory_space<vmem>>, %arg13: memref<1x1x32xf32, #tpu.memory_space<vmem>>, %arg14: memref<1x1x32xf32, #tpu.memory_space<vmem>>, %arg15: memref<1x1x32xf32, #tpu.memory_space<vmem>>, %arg16: memref<1x32x128xbf16, #tpu.memory_space<vmem>>, %arg17: memref<1x1x128xf32, #tpu.memory_space<vmem>>, %arg18: memref<1x128x32xbf16, #tpu.memory_space<vmem>>, %arg19: memref<1x1x32xf32, #tpu.memory_space<vmem>>, %arg20: memref<1x8x32xf32, #tpu.memory_space<vmem>>, %arg21: memref<8x32xf32, #tpu.memory_space<vmem>>) attributes {dimension_semantics = [#tpu.dimension_semantics<parallel>, #tpu.dimension_semantics<arbitrary>], iteration_bounds = array<i64: 2, 2>, scalar_prefetch = 0 : i64, scratch_operands = 1 : i64, tpu.core_type = #tpu.core_type<tc>, window_params = [{transform_indices = @transform_0, window_bounds = array<i64: 1, 8, 16>}, {pipeline_mode = #tpu.pipeline_mode<synchronous>, transform_indices = @transform_1, window_bounds = array<i64: 16, 32>}, {pipeline_mode = #tpu.pipeline_mode<synchronous>, transform_indices = @transform_2, window_bounds = array<i64: 1, 32>}, {transform_indices = @transform_3, window_bounds = array<i64: 1, 1, 32>}, {transform_indices = @transform_4, window_bounds = array<i64: 1, 1, 32>}, {transform_indices = @transform_5, window_bounds = array<i64: 1, 1, 32>}, {transform_indices = @transform_6, window_bounds = array<i64: 1, 1, 32>}, {transform_indices = @transform_7, window_bounds = array<i64: 1, 32, 32>}, {transform_indices = @transform_8, window_bounds = array<i64: 1, 32, 16>}, {transform_indices = @transform_9, window_bounds = array<i64: 1, 32, 32>}, {transform_indices = @transform_10, window_bounds = array<i64: 1, 1, 32>}, {transform_indices = @transform_11, window_bounds = array<i64: 1, 1, 32>}, {transform_indices = @transform_12, window_bounds = array<i64: 1, 1, 32>}, {transform_indices = @transform_13, window_bounds = array<i64: 1, 1, 32>}, {transform_indices = @transform_14, window_bounds = array<i64: 1, 32, 128>}, {transform_indices = @transform_15, window_bounds = array<i64: 1, 1, 128>}, {transform_indices = @transform_16, window_bounds = array<i64: 1, 128, 32>}, {transform_indices = @transform_17, window_bounds = array<i64: 1, 1, 32>}, {transform_indices = @transform_18, window_bounds = array<i64: 1, 8, 32>}]} {
    %c0_i32 = arith.constant 0 : i32
    %0 = arith.cmpi eq, %arg1, %c0_i32 : i32
    %1 = arith.extui %0 : i1 to i32
    %c0_i32_0 = arith.constant 0 : i32
    %2 = arith.cmpi ne, %1, %c0_i32_0 : i32
    scf.if %2 {
      %c0_95 = arith.constant 0 : index
      %c0_96 = arith.constant 0 : index
      %c0_97 = arith.constant 0 : index
      %227 = vector.load %arg2[%c0_95, %c0_96, %c0_97] : memref<1x8x16xf32, #tpu.memory_space<vmem>>, vector<1x8x16xf32>
      %228 = vector.shape_cast %227 : vector<1x8x16xf32> to vector<8x16xf32>
      %229 = arith.truncf %228 : vector<8x16xf32> to vector<8x16xbf16>
      %c0_98 = arith.constant 0 : index
      %c0_99 = arith.constant 0 : index
      %230 = vector.load %arg3[%c0_98, %c0_99] : memref<16x32xbf16, #tpu.memory_space<vmem>>, vector<16x32xbf16>
      %cst_100 = arith.constant dense<0.000000e+00> : vector<8x32xf32>
      %231 = tpu.matmul %229, %230, %cst_100 {dimension_numbers = #tpu.dot_dimension_numbers<[1], [0], [0], [1], [0, 0, 1, 1], [], []>} : vector<8x16xbf16>, vector<16x32xbf16>, vector<8x32xf32> -> vector<8x32xf32>
      %c0_101 = arith.constant 0 : index
      %c0_102 = arith.constant 0 : index
      %232 = vector.load %arg4[%c0_101, %c0_102] : memref<1x32xf32, #tpu.memory_space<vmem>>, vector<1x32xf32>
      %233 = vector.broadcast %232 : vector<1x32xf32> to vector<8x32xf32>
      %234 = arith.addf %231, %233 : vector<8x32xf32>
      %c0_103 = arith.constant 0 : index
      %c0_104 = arith.constant 0 : index
      %235 = vector.load %arg21[%c0_103, %c0_104] : memref<8x32xf32, #tpu.memory_space<vmem>>, vector<8x32xf32>
      tpu.vector_store %arg21[%c0_103, %c0_104], %234 {strides = array<i32>} : memref<8x32xf32, #tpu.memory_space<vmem>>, vector<8x32xf32>,
    } else {
    }
    %c0 = arith.constant 0 : index
    %c0_1 = arith.constant 0 : index
    %3 = vector.load %arg21[%c0, %c0_1] : memref<8x32xf32, #tpu.memory_space<vmem>>, vector<8x32xf32>
    %cst = arith.constant dense<0.000000e+00> : vector<8xf32>
    %4 = vector.multi_reduction <add>, %3, %cst [1] : vector<8x32xf32> to vector<8xf32>
    %5 = vector.shape_cast %4 : vector<8xf32> to vector<8x1xf32>
    %cst_2 = arith.constant 3.200000e+01 : f32
    %6 = vector.broadcast %cst_2 : f32 to vector<8x1xf32>
    %7 = arith.divf %5, %6 : vector<8x1xf32>
    %8 = vector.broadcast %7 : vector<8x1xf32> to vector<8x32xf32>
    %9 = arith.subf %3, %8 : vector<8x32xf32>
    %10 = vector.broadcast %7 : vector<8x1xf32> to vector<8x32xf32>
    %11 = arith.subf %3, %10 : vector<8x32xf32>
    %12 = arith.mulf %9, %11 : vector<8x32xf32>
    %cst_3 = arith.constant dense<0.000000e+00> : vector<8xf32>
    %13 = vector.multi_reduction <add>, %12, %cst_3 [1] : vector<8x32xf32> to vector<8xf32>
    %14 = vector.shape_cast %13 : vector<8xf32> to vector<8x1xf32>
    %cst_4 = arith.constant 3.200000e+01 : f32
    %15 = vector.broadcast %cst_4 : f32 to vector<8x1xf32>
    %16 = arith.divf %14, %15 : vector<8x1xf32>
    %17 = vector.broadcast %7 : vector<8x1xf32> to vector<8x32xf32>
    %18 = arith.subf %3, %17 : vector<8x32xf32>
    %cst_5 = arith.constant 9.99999974E-6 : f32
    %19 = vector.broadcast %cst_5 : f32 to vector<8x1xf32>
    %20 = arith.addf %16, %19 : vector<8x1xf32>
    %21 = math.rsqrt %20 : vector<8x1xf32>
    %22 = vector.broadcast %21 : vector<8x1xf32> to vector<8x32xf32>
    %23 = arith.mulf %18, %22 : vector<8x32xf32>
    %c0_6 = arith.constant 0 : index
    %c0_7 = arith.constant 0 : index
    %c0_8 = arith.constant 0 : index
    %24 = vector.load %arg5[%c0_6, %c0_7, %c0_8] : memref<1x1x32xf32, #tpu.memory_space<vmem>>, vector<1x1x32xf32>
    %25 = vector.shape_cast %24 : vector<1x1x32xf32> to vector<1x32xf32>
    %26 = vector.broadcast %25 : vector<1x32xf32> to vector<8x32xf32>
    %27 = arith.mulf %23, %26 : vector<8x32xf32>
    %c0_9 = arith.constant 0 : index
    %c0_10 = arith.constant 0 : index
    %c0_11 = arith.constant 0 : index
    %28 = vector.load %arg6[%c0_9, %c0_10, %c0_11] : memref<1x1x32xf32, #tpu.memory_space<vmem>>, vector<1x1x32xf32>
    %29 = vector.shape_cast %28 : vector<1x1x32xf32> to vector<1x32xf32>
    %30 = vector.broadcast %29 : vector<1x32xf32> to vector<8x32xf32>
    %31 = arith.addf %27, %30 : vector<8x32xf32>
    %cst_12 = arith.constant dense<0.000000e+00> : vector<8xf32>
    %32 = vector.multi_reduction <add>, %31, %cst_12 [1] : vector<8x32xf32> to vector<8xf32>
    %33 = vector.shape_cast %32 : vector<8xf32> to vector<8x1xf32>
    %cst_13 = arith.constant 3.200000e+01 : f32
    %34 = vector.broadcast %cst_13 : f32 to vector<8x1xf32>
    %35 = arith.divf %33, %34 : vector<8x1xf32>
    %36 = vector.broadcast %35 : vector<8x1xf32> to vector<8x32xf32>
    %37 = arith.subf %31, %36 : vector<8x32xf32>
    %38 = vector.broadcast %35 : vector<8x1xf32> to vector<8x32xf32>
    %39 = arith.subf %31, %38 : vector<8x32xf32>
    %40 = arith.mulf %37, %39 : vector<8x32xf32>
    %cst_14 = arith.constant dense<0.000000e+00> : vector<8xf32>
    %41 = vector.multi_reduction <add>, %40, %cst_14 [1] : vector<8x32xf32> to vector<8xf32>
    %42 = vector.shape_cast %41 : vector<8xf32> to vector<8x1xf32>
    %cst_15 = arith.constant 3.200000e+01 : f32
    %43 = vector.broadcast %cst_15 : f32 to vector<8x1xf32>
    %44 = arith.divf %42, %43 : vector<8x1xf32>
    %45 = vector.broadcast %35 : vector<8x1xf32> to vector<8x32xf32>
    %46 = arith.subf %31, %45 : vector<8x32xf32>
    %cst_16 = arith.constant 9.99999974E-6 : f32
    %47 = vector.broadcast %cst_16 : f32 to vector<8x1xf32>
    %48 = arith.addf %44, %47 : vector<8x1xf32>
    %49 = math.rsqrt %48 : vector<8x1xf32>
    %50 = vector.broadcast %49 : vector<8x1xf32> to vector<8x32xf32>
    %51 = arith.mulf %46, %50 : vector<8x32xf32>
    %c0_17 = arith.constant 0 : index
    %c0_18 = arith.constant 0 : index
    %c0_19 = arith.constant 0 : index
    %52 = vector.load %arg7[%c0_17, %c0_18, %c0_19] : memref<1x1x32xf32, #tpu.memory_space<vmem>>, vector<1x1x32xf32>
    %53 = vector.shape_cast %52 : vector<1x1x32xf32> to vector<1x32xf32>
    %54 = vector.broadcast %53 : vector<1x32xf32> to vector<8x32xf32>
    %55 = arith.mulf %51, %54 : vector<8x32xf32>
    %c0_20 = arith.constant 0 : index
    %c0_21 = arith.constant 0 : index
    %c0_22 = arith.constant 0 : index
    %56 = vector.load %arg8[%c0_20, %c0_21, %c0_22] : memref<1x1x32xf32, #tpu.memory_space<vmem>>, vector<1x1x32xf32>
    %57 = vector.shape_cast %56 : vector<1x1x32xf32> to vector<1x32xf32>
    %58 = vector.broadcast %57 : vector<1x32xf32> to vector<8x32xf32>
    %59 = arith.addf %55, %58 : vector<8x32xf32>
    %60 = arith.truncf %59 : vector<8x32xf32> to vector<8x32xbf16>
    %c0_23 = arith.constant 0 : index
    %c0_24 = arith.constant 0 : index
    %c0_25 = arith.constant 0 : index
    %61 = vector.load %arg9[%c0_23, %c0_24, %c0_25] : memref<1x32x32xbf16, #tpu.memory_space<vmem>>, vector<1x32x32xbf16>
    %62 = vector.shape_cast %61 : vector<1x32x32xbf16> to vector<32x32xbf16>
    %cst_26 = arith.constant dense<0.000000e+00> : vector<8x32xf32>
    %63 = tpu.matmul %60, %62, %cst_26 {dimension_numbers = #tpu.dot_dimension_numbers<[1], [0], [0], [1], [0, 0, 1, 1], [], []>} : vector<8x32xbf16>, vector<32x32xbf16>, vector<8x32xf32> -> vector<8x32xf32>
    %c0_27 = arith.constant 0 : index
    %c0_28 = arith.constant 0 : index
    %c0_29 = arith.constant 0 : index
    %64 = vector.load %arg10[%c0_27, %c0_28, %c0_29] : memref<1x32x16xbf16, #tpu.memory_space<vmem>>, vector<1x32x16xbf16>
    %65 = vector.shape_cast %64 : vector<1x32x16xbf16> to vector<32x16xbf16>
    %cst_30 = arith.constant dense<0.000000e+00> : vector<8x16xf32>
    %66 = tpu.matmul %60, %65, %cst_30 {dimension_numbers = #tpu.dot_dimension_numbers<[1], [0], [0], [1], [0, 0, 1, 1], [], []>} : vector<8x32xbf16>, vector<32x16xbf16>, vector<8x16xf32> -> vector<8x16xf32>
    %67 = vector.extract_strided_slice %66 {offsets = [0, 0], sizes = [8, 8], strides = [1, 1]} : vector<8x16xf32> to vector<8x8xf32>
    %68 = vector.extract_strided_slice %66 {offsets = [0, 8], sizes = [8, 8], strides = [1, 1]} : vector<8x16xf32> to vector<8x8xf32>
    %cst_31 = arith.constant 0.210224107 : f32
    %69 = vector.broadcast %cst_31 : f32 to vector<8x32xf32>
    %70 = arith.mulf %63, %69 : vector<8x32xf32>
    %cst_32 = arith.constant 0.594603539 : f32
    %71 = vector.broadcast %cst_32 : f32 to vector<8x8xf32>
    %72 = arith.mulf %67, %71 : vector<8x8xf32>
    %73 = vector.extract_strided_slice %70 {offsets = [0, 0], sizes = [8, 8], strides = [1, 1]} : vector<8x32xf32> to vector<8x8xf32>
    %74 = vector.extract_strided_slice %70 {offsets = [0, 8], sizes = [8, 8], strides = [1, 1]} : vector<8x32xf32> to vector<8x8xf32>
    %75 = vector.extract_strided_slice %70 {offsets = [0, 16], sizes = [8, 8], strides = [1, 1]} : vector<8x32xf32> to vector<8x8xf32>
    %76 = vector.extract_strided_slice %70 {offsets = [0, 24], sizes = [8, 8], strides = [1, 1]} : vector<8x32xf32> to vector<8x8xf32>
    %77 = tpu.concatenate %73, %74, %75, %76 in 0 : vector<8x8xf32>, vector<8x8xf32>, vector<8x8xf32>, vector<8x8xf32> -> vector<32x8xf32>
    %78 = arith.truncf %77 : vector<32x8xf32> to vector<32x8xbf16>
    %79 = arith.truncf %72 : vector<8x8xf32> to vector<8x8xbf16>
    %cst_33 = arith.constant dense<0.000000e+00> : vector<32x8xf32>
    %80 = tpu.matmul %78, %79, %cst_33 {dimension_numbers = #tpu.dot_dimension_numbers<[1], [1], [0], [0], [0, 0, 1, 0], [], []>} : vector<32x8xbf16>, vector<8x8xbf16>, vector<32x8xf32> -> vector<32x8xf32>
    %81 = tpu.iota {dimensions = array<i32: 0>} : vector<8x1xi32>
    %82 = tpu.concatenate %81, %81, %81, %81 in 0 : vector<8x1xi32>, vector<8x1xi32>, vector<8x1xi32>, vector<8x1xi32> -> vector<32x1xi32>
    %83 = tpu.iota {dimensions = array<i32: 1>} : vector<32x8xi32>
    %84 = vector.broadcast %82 : vector<32x1xi32> to vector<32x8xi32>
    %85 = arith.cmpi sgt, %83, %84 : vector<32x8xi32>
    %cst_34 = arith.constant -3.40282347E+38 : f32
    %86 = vector.broadcast %cst_34 : f32 to vector<32x8xf32>
    %87 = arith.select %85, %86, %80 : vector<32x8xi1>, vector<32x8xf32>
    %cst_35 = arith.constant dense<0xFF800000> : vector<32xf32>
    %88 = vector.multi_reduction <maximumf>, %87, %cst_35 [1] : vector<32x8xf32> to vector<32xf32>
    %89 = vector.shape_cast %88 : vector<32xf32> to vector<32x1xf32>
    %90 = vector.broadcast %89 : vector<32x1xf32> to vector<32x8xf32>
    %91 = arith.subf %87, %90 : vector<32x8xf32>
    %92 = math.exp %91 : vector<32x8xf32>
    %cst_36 = arith.constant dense<0.000000e+00> : vector<32xf32>
    %93 = vector.multi_reduction <add>, %92, %cst_36 [1] : vector<32x8xf32> to vector<32xf32>
    %94 = vector.shape_cast %93 : vector<32xf32> to vector<32x1xf32>
    %95 = tpu.reciprocal %94 {approx = true} : vector<32x1xf32> -> vector<32x1xf32>
    %96 = vector.broadcast %95 : vector<32x1xf32> to vector<32x8xf32>
    %97 = arith.mulf %92, %96 : vector<32x8xf32>
    %98 = arith.truncf %97 : vector<32x8xf32> to vector<32x8xbf16>
    %99 = arith.truncf %68 : vector<8x8xf32> to vector<8x8xbf16>
    %cst_37 = arith.constant dense<0.000000e+00> : vector<32x8xf32>
    %100 = tpu.matmul %98, %99, %cst_37 {dimension_numbers = #tpu.dot_dimension_numbers<[1], [0], [0], [1], [0, 0, 1, 1], [], []>} : vector<32x8xbf16>, vector<8x8xbf16>, vector<32x8xf32> -> vector<32x8xf32>
    %101 = vector.extract_strided_slice %100 {offsets = [0, 0], sizes = [8, 8], strides = [1, 1]} : vector<32x8xf32> to vector<8x8xf32>
    %102 = vector.extract_strided_slice %100 {offsets = [8, 0], sizes = [8, 8], strides = [1, 1]} : vector<32x8xf32> to vector<8x8xf32>
    %103 = vector.extract_strided_slice %100 {offsets = [16, 0], sizes = [8, 8], strides = [1, 1]} : vector<32x8xf32> to vector<8x8xf32>
    %104 = vector.extract_strided_slice %100 {offsets = [24, 0], sizes = [8, 8], strides = [1, 1]} : vector<32x8xf32> to vector<8x8xf32>
    %105 = tpu.concatenate %101, %102, %103, %104 in 1 : vector<8x8xf32>, vector<8x8xf32>, vector<8x8xf32>, vector<8x8xf32> -> vector<8x32xf32>
    %106 = arith.truncf %105 : vector<8x32xf32> to vector<8x32xbf16>
    %c0_38 = arith.constant 0 : index
    %c0_39 = arith.constant 0 : index
    %c0_40 = arith.constant 0 : index
    %107 = vector.load %arg11[%c0_38, %c0_39, %c0_40] : memref<1x32x32xbf16, #tpu.memory_space<vmem>>, vector<1x32x32xbf16>
    %108 = vector.shape_cast %107 : vector<1x32x32xbf16> to vector<32x32xbf16>
    %cst_41 = arith.constant dense<0.000000e+00> : vector<8x32xf32>
    %109 = tpu.matmul %106, %108, %cst_41 {dimension_numbers = #tpu.dot_dimension_numbers<[1], [0], [0], [1], [0, 0, 1, 1], [], []>} : vector<8x32xbf16>, vector<32x32xbf16>, vector<8x32xf32> -> vector<8x32xf32>
    %cst_42 = arith.constant dense<0.000000e+00> : vector<8xf32>
    %110 = vector.multi_reduction <add>, %109, %cst_42 [1] : vector<8x32xf32> to vector<8xf32>
    %111 = vector.shape_cast %110 : vector<8xf32> to vector<8x1xf32>
    %cst_43 = arith.constant 3.200000e+01 : f32
    %112 = vector.broadcast %cst_43 : f32 to vector<8x1xf32>
    %113 = arith.divf %111, %112 : vector<8x1xf32>
    %114 = vector.broadcast %113 : vector<8x1xf32> to vector<8x32xf32>
    %115 = arith.subf %109, %114 : vector<8x32xf32>
    %116 = vector.broadcast %113 : vector<8x1xf32> to vector<8x32xf32>
    %117 = arith.subf %109, %116 : vector<8x32xf32>
    %118 = arith.mulf %115, %117 : vector<8x32xf32>
    %cst_44 = arith.constant dense<0.000000e+00> : vector<8xf32>
    %119 = vector.multi_reduction <add>, %118, %cst_44 [1] : vector<8x32xf32> to vector<8xf32>
    %120 = vector.shape_cast %119 : vector<8xf32> to vector<8x1xf32>
    %cst_45 = arith.constant 3.200000e+01 : f32
    %121 = vector.broadcast %cst_45 : f32 to vector<8x1xf32>
    %122 = arith.divf %120, %121 : vector<8x1xf32>
    %123 = vector.broadcast %113 : vector<8x1xf32> to vector<8x32xf32>
    %124 = arith.subf %109, %123 : vector<8x32xf32>
    %cst_46 = arith.constant 9.99999974E-6 : f32
    %125 = vector.broadcast %cst_46 : f32 to vector<8x1xf32>
    %126 = arith.addf %122, %125 : vector<8x1xf32>
    %127 = math.rsqrt %126 : vector<8x1xf32>
    %128 = vector.broadcast %127 : vector<8x1xf32> to vector<8x32xf32>
    %129 = arith.mulf %124, %128 : vector<8x32xf32>
    %c0_47 = arith.constant 0 : index
    %c0_48 = arith.constant 0 : index
    %c0_49 = arith.constant 0 : index
    %130 = vector.load %arg12[%c0_47, %c0_48, %c0_49] : memref<1x1x32xf32, #tpu.memory_space<vmem>>, vector<1x1x32xf32>
    %131 = vector.shape_cast %130 : vector<1x1x32xf32> to vector<1x32xf32>
    %132 = vector.broadcast %131 : vector<1x32xf32> to vector<8x32xf32>
    %133 = arith.mulf %129, %132 : vector<8x32xf32>
    %c0_50 = arith.constant 0 : index
    %c0_51 = arith.constant 0 : index
    %c0_52 = arith.constant 0 : index
    %134 = vector.load %arg13[%c0_50, %c0_51, %c0_52] : memref<1x1x32xf32, #tpu.memory_space<vmem>>, vector<1x1x32xf32>
    %135 = vector.shape_cast %134 : vector<1x1x32xf32> to vector<1x32xf32>
    %136 = vector.broadcast %135 : vector<1x32xf32> to vector<8x32xf32>
    %137 = arith.addf %133, %136 : vector<8x32xf32>
    %138 = arith.addf %3, %137 : vector<8x32xf32>
    %cst_53 = arith.constant dense<0.000000e+00> : vector<8xf32>
    %139 = vector.multi_reduction <add>, %138, %cst_53 [1] : vector<8x32xf32> to vector<8xf32>
    %140 = vector.shape_cast %139 : vector<8xf32> to vector<8x1xf32>
    %cst_54 = arith.constant 3.200000e+01 : f32
    %141 = vector.broadcast %cst_54 : f32 to vector<8x1xf32>
    %142 = arith.divf %140, %141 : vector<8x1xf32>
    %143 = vector.broadcast %142 : vector<8x1xf32> to vector<8x32xf32>
    %144 = arith.subf %138, %143 : vector<8x32xf32>
    %145 = vector.broadcast %142 : vector<8x1xf32> to vector<8x32xf32>
    %146 = arith.subf %138, %145 : vector<8x32xf32>
    %147 = arith.mulf %144, %146 : vector<8x32xf32>
    %cst_55 = arith.constant dense<0.000000e+00> : vector<8xf32>
    %148 = vector.multi_reduction <add>, %147, %cst_55 [1] : vector<8x32xf32> to vector<8xf32>
    %149 = vector.shape_cast %148 : vector<8xf32> to vector<8x1xf32>
    %cst_56 = arith.constant 3.200000e+01 : f32
    %150 = vector.broadcast %cst_56 : f32 to vector<8x1xf32>
    %151 = arith.divf %149, %150 : vector<8x1xf32>
    %152 = vector.broadcast %142 : vector<8x1xf32> to vector<8x32xf32>
    %153 = arith.subf %138, %152 : vector<8x32xf32>
    %cst_57 = arith.constant 9.99999974E-6 : f32
    %154 = vector.broadcast %cst_57 : f32 to vector<8x1xf32>
    %155 = arith.addf %151, %154 : vector<8x1xf32>
    %156 = math.rsqrt %155 : vector<8x1xf32>
    %157 = vector.broadcast %156 : vector<8x1xf32> to vector<8x32xf32>
    %158 = arith.mulf %153, %157 : vector<8x32xf32>
    %c0_58 = arith.constant 0 : index
    %c0_59 = arith.constant 0 : index
    %c0_60 = arith.constant 0 : index
    %159 = vector.load %arg14[%c0_58, %c0_59, %c0_60] : memref<1x1x32xf32, #tpu.memory_space<vmem>>, vector<1x1x32xf32>
    %160 = vector.shape_cast %159 : vector<1x1x32xf32> to vector<1x32xf32>
    %161 = vector.broadcast %160 : vector<1x32xf32> to vector<8x32xf32>
    %162 = arith.mulf %158, %161 : vector<8x32xf32>
    %c0_61 = arith.constant 0 : index
    %c0_62 = arith.constant 0 : index
    %c0_63 = arith.constant 0 : index
    %163 = vector.load %arg15[%c0_61, %c0_62, %c0_63] : memref<1x1x32xf32, #tpu.memory_space<vmem>>, vector<1x1x32xf32>
    %164 = vector.shape_cast %163 : vector<1x1x32xf32> to vector<1x32xf32>
    %165 = vector.broadcast %164 : vector<1x32xf32> to vector<8x32xf32>
    %166 = arith.addf %162, %165 : vector<8x32xf32>
    %167 = arith.truncf %166 : vector<8x32xf32> to vector<8x32xbf16>
    %c0_64 = arith.constant 0 : index
    %c0_65 = arith.constant 0 : index
    %c0_66 = arith.constant 0 : index
    %168 = vector.load %arg16[%c0_64, %c0_65, %c0_66] : memref<1x32x128xbf16, #tpu.memory_space<vmem>>, vector<1x32x128xbf16>
    %169 = vector.shape_cast %168 : vector<1x32x128xbf16> to vector<32x128xbf16>
    %cst_67 = arith.constant dense<0.000000e+00> : vector<8x128xf32>
    %170 = tpu.matmul %167, %169, %cst_67 {dimension_numbers = #tpu.dot_dimension_numbers<[1], [0], [0], [1], [0, 0, 1, 1], [], []>} : vector<8x32xbf16>, vector<32x128xbf16>, vector<8x128xf32> -> vector<8x128xf32>
    %c0_68 = arith.constant 0 : index
    %c0_69 = arith.constant 0 : index
    %c0_70 = arith.constant 0 : index
    %171 = vector.load %arg17[%c0_68, %c0_69, %c0_70] : memref<1x1x128xf32, #tpu.memory_space<vmem>>, vector<1x1x128xf32>
    %172 = vector.shape_cast %171 : vector<1x1x128xf32> to vector<1x128xf32>
    %173 = vector.broadcast %172 : vector<1x128xf32> to vector<8x128xf32>
    %174 = arith.addf %170, %173 : vector<8x128xf32>
    %cst_71 = arith.constant 5.000000e-01 : f32
    %175 = vector.broadcast %cst_71 : f32 to vector<8x128xf32>
    %176 = arith.mulf %175, %174 : vector<8x128xf32>
    %cst_72 = arith.constant 0.707106769 : f32
    %177 = vector.broadcast %cst_72 : f32 to vector<8x128xf32>
    %178 = arith.mulf %174, %177 : vector<8x128xf32>
    %179 = math.absf %178 : vector<8x128xf32>
    %cst_73 = arith.constant 0.327591091 : f32
    %180 = vector.broadcast %cst_73 : f32 to vector<8x128xf32>
    %181 = arith.mulf %180, %179 : vector<8x128xf32>
    %cst_74 = arith.constant 1.000000e+00 : f32
    %182 = vector.broadcast %cst_74 : f32 to vector<8x128xf32>
    %183 = arith.addf %182, %181 : vector<8x128xf32>
    %184 = tpu.reciprocal %183 {approx = true} : vector<8x128xf32> -> vector<8x128xf32>
    %cst_75 = arith.constant 1.06140542 : f32
    %185 = vector.broadcast %cst_75 : f32 to vector<8x128xf32>
    %186 = arith.mulf %185, %184 : vector<8x128xf32>
    %cst_76 = arith.constant -1.45315206 : f32
    %187 = vector.broadcast %cst_76 : f32 to vector<8x128xf32>
    %188 = arith.addf %186, %187 : vector<8x128xf32>
    %189 = arith.mulf %188, %184 : vector<8x128xf32>
    %cst_77 = arith.constant 1.42141378 : f32
    %190 = vector.broadcast %cst_77 : f32 to vector<8x128xf32>
    %191 = arith.addf %189, %190 : vector<8x128xf32>
    %192 = arith.mulf %191, %184 : vector<8x128xf32>
    %cst_78 = arith.constant -0.284496725 : f32
    %193 = vector.broadcast %cst_78 : f32 to vector<8x128xf32>
    %194 = arith.addf %192, %193 : vector<8x128xf32>
    %195 = arith.mulf %194, %184 : vector<8x128xf32>
    %cst_79 = arith.constant 0.254829586 : f32
    %196 = vector.broadcast %cst_79 : f32 to vector<8x128xf32>
    %197 = arith.addf %195, %196 : vector<8x128xf32>
    %198 = arith.mulf %197, %184 : vector<8x128xf32>
    %cst_80 = arith.constant 0.000000e+00 : f32
    %199 = vector.broadcast %cst_80 : f32 to vector<8x128xf32>
    %200 = arith.subf %199, %179 : vector<8x128xf32>
    %201 = arith.mulf %200, %179 : vector<8x128xf32>
    %202 = math.exp %201 : vector<8x128xf32>
    %203 = arith.mulf %198, %202 : vector<8x128xf32>
    %cst_81 = arith.constant 1.000000e+00 : f32
    %204 = vector.broadcast %cst_81 : f32 to vector<8x128xf32>
    %205 = arith.subf %204, %203 : vector<8x128xf32>
    %cst_82 = arith.constant 0.000000e+00 : f32
    %206 = vector.broadcast %cst_82 : f32 to vector<8x128xf32>
    %207 = arith.cmpf oge, %178, %206 : vector<8x128xf32>
    %cst_83 = arith.constant 0.000000e+00 : f32
    %208 = vector.broadcast %cst_83 : f32 to vector<8x128xf32>
    %209 = arith.subf %208, %205 : vector<8x128xf32>
    %210 = arith.select %207, %205, %209 : vector<8x128xi1>, vector<8x128xf32>
    %cst_84 = arith.constant 1.000000e+00 : f32
    %211 = vector.broadcast %cst_84 : f32 to vector<8x128xf32>
    %212 = arith.addf %211, %210 : vector<8x128xf32>
    %213 = arith.mulf %176, %212 : vector<8x128xf32>
    %214 = arith.truncf %213 : vector<8x128xf32> to vector<8x128xbf16>
    %c0_85 = arith.constant 0 : index
    %c0_86 = arith.constant 0 : index
    %c0_87 = arith.constant 0 : index
    %215 = vector.load %arg18[%c0_85, %c0_86, %c0_87] : memref<1x128x32xbf16, #tpu.memory_space<vmem>>, vector<1x128x32xbf16>
    %216 = vector.shape_cast %215 : vector<1x128x32xbf16> to vector<128x32xbf16>
    %cst_88 = arith.constant dense<0.000000e+00> : vector<8x32xf32>
    %217 = tpu.matmul %214, %216, %cst_88 {dimension_numbers = #tpu.dot_dimension_numbers<[1], [0], [0], [1], [0, 0, 1, 1], [], []>} : vector<8x128xbf16>, vector<128x32xbf16>, vector<8x32xf32> -> vector<8x32xf32>
    %c0_89 = arith.constant 0 : index
    %c0_90 = arith.constant 0 : index
    %c0_91 = arith.constant 0 : index
    %218 = vector.load %arg19[%c0_89, %c0_90, %c0_91] : memref<1x1x32xf32, #tpu.memory_space<vmem>>, vector<1x1x32xf32>
    %219 = vector.shape_cast %218 : vector<1x1x32xf32> to vector<1x32xf32>
    %220 = vector.broadcast %219 : vector<1x32xf32> to vector<8x32xf32>
    %221 = arith.addf %217, %220 : vector<8x32xf32>
    %222 = arith.addf %138, %221 : vector<8x32xf32>
    %c0_92 = arith.constant 0 : index
    %c0_93 = arith.constant 0 : index
    %223 = vector.load %arg21[%c0_92, %c0_93] : memref<8x32xf32, #tpu.memory_space<vmem>>, vector<8x32xf32>
    tpu.vector_store %arg21[%c0_92, %c0_93], %222 {strides = array<i32>} : memref<8x32xf32, #tpu.memory_space<vmem>>, vector<8x32xf32>,
    %c1_i32 = arith.constant 1 : i32
    %224 = arith.cmpi eq, %arg1, %c1_i32 : i32
    %225 = arith.extui %224 : i1 to i32
    %c0_i32_94 = arith.constant 0 : i32
    %226 = arith.cmpi ne, %225, %c0_i32_94 : i32
    scf.if %226 {
      %c0_95 = arith.constant 0 : index
      %c0_96 = arith.constant 0 : index
      %227 = vector.load %arg21[%c0_95, %c0_96] : memref<8x32xf32, #tpu.memory_space<vmem>>, vector<8x32xf32>
      %c0_97 = arith.constant 0 : index
      %c0_98 = arith.constant 0 : index
      %c0_99 = arith.constant 0 : index
      %228 = vector.load %arg20[%c0_97, %c0_98, %c0_99] : memref<1x8x32xf32, #tpu.memory_space<vmem>>, vector<1x8x32xf32>
      %229 = vector.shape_cast %228 : vector<1x8x32xf32> to vector<8x32xf32>
      %230 = vector.shape_cast %227 : vector<8x32xf32> to vector<1x8x32xf32>
      tpu.vector_store %arg20[%c0_97, %c0_98, %c0_99], %230 {strides = array<i32>} : memref<1x8x32xf32, #tpu.memory_space<vmem>>, vector<1x8x32xf32>,
    } else {
    }
    return
  }
  func.func @transform_0(%arg0: i32, %arg1: i32) -> (i32, i32, i32) {
    %c0_i32 = arith.constant 0 : i32
    %c0_i32_0 = arith.constant 0 : i32
    %c0_i32_1 = arith.constant 0 : i32
    return %arg0, %c0_i32, %c0_i32_0 : i32, i32, i32
  }
  func.func @transform_1(%arg0: i32, %arg1: i32) -> (i32, i32) {
    %c0_i32 = arith.constant 0 : i32
    %c0_i32_0 = arith.constant 0 : i32
    %c0_i32_1 = arith.constant 0 : i32
    return %c0_i32, %c0_i32_0 : i32, i32
  }
  func.func @transform_2(%arg0: i32, %arg1: i32) -> (i32, i32) {
    %c0_i32 = arith.constant 0 : i32
    %c0_i32_0 = arith.constant 0 : i32
    %c0_i32_1 = arith.constant 0 : i32
    return %c0_i32, %c0_i32_0 : i32, i32
  }
  func.func @transform_3(%arg0: i32, %arg1: i32) -> (i32, i32, i32) {
    %c0_i32 = arith.constant 0 : i32
    %c0_i32_0 = arith.constant 0 : i32
    %c0_i32_1 = arith.constant 0 : i32
    return %arg1, %c0_i32, %c0_i32_0 : i32, i32, i32
  }
  func.func @transform_4(%arg0: i32, %arg1: i32) -> (i32, i32, i32) {
    %c0_i32 = arith.constant 0 : i32
    %c0_i32_0 = arith.constant 0 : i32
    %c0_i32_1 = arith.constant 0 : i32
    return %arg1, %c0_i32, %c0_i32_0 : i32, i32, i32
  }
  func.func @transform_5(%arg0: i32, %arg1: i32) -> (i32, i32, i32) {
    %c0_i32 = arith.constant 0 : i32
    %c0_i32_0 = arith.constant 0 : i32
    %c0_i32_1 = arith.constant 0 : i32
    return %arg1, %c0_i32, %c0_i32_0 : i32, i32, i32
  }
  func.func @transform_6(%arg0: i32, %arg1: i32) -> (i32, i32, i32) {
    %c0_i32 = arith.constant 0 : i32
    %c0_i32_0 = arith.constant 0 : i32
    %c0_i32_1 = arith.constant 0 : i32
    return %arg1, %c0_i32, %c0_i32_0 : i32, i32, i32
  }
  func.func @transform_7(%arg0: i32, %arg1: i32) -> (i32, i32, i32) {
    %c0_i32 = arith.constant 0 : i32
    %c0_i32_0 = arith.constant 0 : i32
    %c0_i32_1 = arith.constant 0 : i32
    return %arg1, %c0_i32, %c0_i32_0 : i32, i32, i32
  }
  func.func @transform_8(%arg0: i32, %arg1: i32) -> (i32, i32, i32) {
    %c0_i32 = arith.constant 0 : i32
    %c0_i32_0 = arith.constant 0 : i32
    %c0_i32_1 = arith.constant 0 : i32
    return %arg1, %c0_i32, %c0_i32_0 : i32, i32, i32
  }
  func.func @transform_9(%arg0: i32, %arg1: i32) -> (i32, i32, i32) {
    %c0_i32 = arith.constant 0 : i32
    %c0_i32_0 = arith.constant 0 : i32
    %c0_i32_1 = arith.constant 0 : i32
    return %arg1, %c0_i32, %c0_i32_0 : i32, i32, i32
  }
  func.func @transform_10(%arg0: i32, %arg1: i32) -> (i32, i32, i32) {
    %c0_i32 = arith.constant 0 : i32
    %c0_i32_0 = arith.constant 0 : i32
    %c0_i32_1 = arith.constant 0 : i32
    return %arg1, %c0_i32, %c0_i32_0 : i32, i32, i32
  }
  func.func @transform_11(%arg0: i32, %arg1: i32) -> (i32, i32, i32) {
    %c0_i32 = arith.constant 0 : i32
    %c0_i32_0 = arith.constant 0 : i32
    %c0_i32_1 = arith.constant 0 : i32
    return %arg1, %c0_i32, %c0_i32_0 : i32, i32, i32
  }
  func.func @transform_12(%arg0: i32, %arg1: i32) -> (i32, i32, i32) {
    %c0_i32 = arith.constant 0 : i32
    %c0_i32_0 = arith.constant 0 : i32
    %c0_i32_1 = arith.constant 0 : i32
    return %arg1, %c0_i32, %c0_i32_0 : i32, i32, i32
  }
  func.func @transform_13(%arg0: i32, %arg1: i32) -> (i32, i32, i32) {
    %c0_i32 = arith.constant 0 : i32
    %c0_i32_0 = arith.constant 0 : i32
    %c0_i32_1 = arith.constant 0 : i32
    return %arg1, %c0_i32, %c0_i32_0 : i32, i32, i32
  }
  func.func @transform_14(%arg0: i32, %arg1: i32) -> (i32, i32, i32) {
    %c0_i32 = arith.constant 0 : i32
    %c0_i32_0 = arith.constant 0 : i32
    %c0_i32_1 = arith.constant 0 : i32
    return %arg1, %c0_i32, %c0_i32_0 : i32, i32, i32
  }
  func.func @transform_15(%arg0: i32, %arg1: i32) -> (i32, i32, i32) {
    %c0_i32 = arith.constant 0 : i32
    %c0_i32_0 = arith.constant 0 : i32
    %c0_i32_1 = arith.constant 0 : i32
    return %arg1, %c0_i32, %c0_i32_0 : i32, i32, i32
  }
  func.func @transform_16(%arg0: i32, %arg1: i32) -> (i32, i32, i32) {
    %c0_i32 = arith.constant 0 : i32
    %c0_i32_0 = arith.constant 0 : i32
    %c0_i32_1 = arith.constant 0 : i32
    return %arg1, %c0_i32, %c0_i32_0 : i32, i32, i32
  }
  func.func @transform_17(%arg0: i32, %arg1: i32) -> (i32, i32, i32) {
    %c0_i32 = arith.constant 0 : i32
    %c0_i32_0 = arith.constant 0 : i32
    %c0_i32_1 = arith.constant 0 : i32
    return %arg1, %c0_i32, %c0_i32_0 : i32, i32, i32
  }
  func.func @transform_18(%arg0: i32, %arg1: i32) -> (i32, i32, i32) {
    %c0_i32 = arith.constant 0 : i32
    %c0_i32_0 = arith.constant 0 : i32
    %c0_i32_1 = arith.constant 0 : i32
    return %arg0, %c0_i32, %c0_i32_0 : i32, i32, i32
  }
}

</mosaic_0001>

<llo_original>
// kernel: tpu_custom_call.1
$region0: #{tpu_custom_call.1}
  #allocation0 [shape = 'u32[]', space=smem, size = 0x4, offset = 0x4, fixed_abs, tag = 'smem constant byte address 0x4 - core index']
  #allocation1 [shape = 'u32[144,128]{1,0:T(1,128)}', space=vmem, size = 0x12000, scoped, tag = 'internal scratch']
  #allocation2 [shape = 'f32[8,32]{1,0:T(8,128)}', space=vmem, size = 0x1000, scoped, tag = 'scratch operand']
  %s0 = inlined_call_operand.vmem [shape: f32[2,8,16], index: 0, kind: input, shape index: {}]
  %s1 = inlined_call_operand.vmem [shape: bf16[16,32], index: 1, kind: input, shape index: {}]
  %s2 = inlined_call_operand.vmem [shape: f32[1,32], index: 2, kind: input, shape index: {}]
  %s3 = inlined_call_operand.vmem [shape: f32[2,1,32], index: 3, kind: input, shape index: {}]
  %s4 = inlined_call_operand.vmem [shape: f32[2,1,32], index: 4, kind: input, shape index: {}]
  %s5 = inlined_call_operand.vmem [shape: f32[2,1,32], index: 5, kind: input, shape index: {}]
  %s6 = inlined_call_operand.vmem [shape: f32[2,1,32], index: 6, kind: input, shape index: {}]
  %s7 = inlined_call_operand.vmem [shape: bf16[2,32,32], index: 7, kind: input, shape index: {}]
  %s8 = inlined_call_operand.vmem [shape: bf16[2,32,16], index: 8, kind: input, shape index: {}]
  %s9 = inlined_call_operand.vmem [shape: bf16[2,32,32], index: 9, kind: input, shape index: {}]
  %s10 = inlined_call_operand.vmem [shape: f32[2,1,32], index: 10, kind: input, shape index: {}]
  %s11 = inlined_call_operand.vmem [shape: f32[2,1,32], index: 11, kind: input, shape index: {}]
  %s12 = inlined_call_operand.vmem [shape: f32[2,1,32], index: 12, kind: input, shape index: {}]
  %s13 = inlined_call_operand.vmem [shape: f32[2,1,32], index: 13, kind: input, shape index: {}]
  %s14 = inlined_call_operand.vmem [shape: bf16[2,32,128], index: 14, kind: input, shape index: {}]
  %s15 = inlined_call_operand.vmem [shape: f32[2,1,128], index: 15, kind: input, shape index: {}]
  %s16 = inlined_call_operand.vmem [shape: bf16[2,128,32], index: 16, kind: input, shape index: {}]
  %s17 = inlined_call_operand.vmem [shape: f32[2,1,32], index: 17, kind: input, shape index: {}]
  %s18 = inlined_call_operand.hbm [shape: f32[2,8,32], index: 18, kind: output, shape index: {}]
  %s19 = sld [smem:[#allocation0]]
  $region113: #{tpu_custom_call.1} parent=0
    _
  %s21 = ssub.s32 1, %s19
  %s22 = scalar_select 0, %s21, %s19
  $region1: #{tpu_custom_call.1} parent=0
    #allocation3 [shape = 'u8[8192]{0}', space=vmem, size = 0x2000, scoped, tag = 'output window, operand 0']
    #allocation4 [shape = 's32[2]{0}', space=sflag, size = 0x8, scoped, tag = 'scoped memory for tpu_custom_call.1']
    %23 = vsyncpa [#allocation4], 0
    %s24 = scalar_lea.sflag [#allocation4], 1
    %25 = vsyncpa %s24, 0
    loop: start=0, step=1, limit=6
    $region2: #{tpu_custom_call.1} parent=1 // loop_pre_header
      _
    $region3: #{tpu_custom_call.1} parent=1 // loop_header
      %s27 = sphi 0, %s31
      %p28 = scmp.ge.s32.totalorder %s27, 6
      %s34 = sphi 0, %s46
      %s35 = sphi 0, %s42
      %s36 = sphi 0, %s34
      %s37 = sphi 0, %s35
      %s38 = sphi 0, %s36
      %s39 = sphi 0, %s37
      %s49 = sphi 0, %s51
      %s52 = sphi 0, %s49
      %s53 = sphi 0, %s52
      %s69 = sphi 0, %s53
      %s73 = sphi 0, %s73
      %s75 = sphi 0, %s73
      %s76 = sphi 0, %s75
      %s90 = sphi 0, %s76
      %s94 = sphi 0, %s94
      %s96 = sphi 0, %s94
      %s97 = sphi 0, %s96
      %s111 = sphi 0, %s97
      %s117 = sphi 0, %s119
      %s120 = sphi 0, %s117
      %s121 = sphi 0, %s120
      %s137 = sphi 0, %s121
      %s143 = sphi 0, %s145
      %s146 = sphi 0, %s143
      %s147 = sphi 0, %s146
      %s163 = sphi 0, %s147
      %s169 = sphi 0, %s171
      %s172 = sphi 0, %s169
      %s173 = sphi 0, %s172
      %s189 = sphi 0, %s173
      %s195 = sphi 0, %s197
      %s198 = sphi 0, %s195
      %s199 = sphi 0, %s198
      %s215 = sphi 0, %s199
      %s221 = sphi 0, %s223
      %s224 = sphi 0, %s221
      %s225 = sphi 0, %s224
      %s241 = sphi 0, %s225
      %s247 = sphi 0, %s249
      %s250 = sphi 0, %s247
      %s251 = sphi 0, %s250
      %s267 = sphi 0, %s251
      %s273 = sphi 0, %s275
      %s276 = sphi 0, %s273
      %s277 = sphi 0, %s276
      %s293 = sphi 0, %s277
      %s299 = sphi 0, %s301
      %s302 = sphi 0, %s299
      %s303 = sphi 0, %s302
      %s319 = sphi 0, %s303
      %s325 = sphi 0, %s327
      %s328 = sphi 0, %s325
      %s329 = sphi 0, %s328
      %s345 = sphi 0, %s329
      %s351 = sphi 0, %s353
      %s354 = sphi 0, %s351
      %s355 = sphi 0, %s354
      %s371 = sphi 0, %s355
      %s377 = sphi 0, %s379
      %s380 = sphi 0, %s377
      %s381 = sphi 0, %s380
      %s397 = sphi 0, %s381
      %s403 = sphi 0, %s405
      %s406 = sphi 0, %s403
      %s407 = sphi 0, %s406
      %s423 = sphi 0, %s407
      %s429 = sphi 0, %s431
      %s432 = sphi 0, %s429
      %s433 = sphi 0, %s432
      %s449 = sphi 0, %s433
      %s455 = sphi 0, %s457
      %s458 = sphi 0, %s455
      %s459 = sphi 0, %s458
      %s475 = sphi 0, %s459
      %s481 = sphi 0, %s483
      %s484 = sphi 0, %s481
      %s485 = sphi 0, %s484
      %s501 = sphi 0, %s485
      %s507 = sphi 0, %s509
      %s510 = sphi 0, %s507
      %s511 = sphi 0, %s510
      %s527 = sphi 0, %s511
    $region4: #{tpu_custom_call.1} parent=1 // loop_header_branch
      %30 = sbr.rel (%p28) target = $region8
    $region5: #{tpu_custom_call.1} parent=1 // loop_body
      %s32 = ssub.s32 %s27, 1
      %s33 = ssub.s32 %s27, 2
      %s40 = sadd.s32 1, %s35
      %p41 = scmp.ge.s32.totalorder %s40, 2
      %s42 = scalar_select %p41, 0, %s40
      %s43 = sadd.s32 1, %s34
      %s44 = scalar_select %p41, %s43, %s34
      %p45 = scmp.ge.s32.totalorder %s44, 2
      %s46 = scalar_select %p45, 0, %s44
      %s47 = ssub.s32 %s34, %s46
      %p48 = scmp.eq.s32.totalorder %s47, 0
      %s50 = sadd.s32 %s49, 1
      %s51 = scalar_select %p48, %s49, %s50
      %p54 = pneg %p48
      %p55 = scmp.eq.s32.totalorder %s27, 3
      %p56 = por %p54, %p55
      %p57 = scmp.ne.s32.totalorder %s49, %s52
      %p58 = scmp.eq.s32.totalorder %s27, 0
      %p59 = por %p57, %p58
      %p60 = scmp.ne.s32.totalorder %s49, %s52
      %p61 = scmp.eq.s32.totalorder %s32, 3
      %p62 = por %p60, %p61
      %p63 = scmp.ne.s32.totalorder %s52, %s53
      %p64 = scmp.eq.s32.totalorder %s32, 0
      %p65 = por %p63, %p64
      %p66 = scmp.ne.s32.totalorder %s52, %s53
      %p67 = scmp.eq.s32.totalorder %s33, 3
      %p68 = por %p66, %p67
      %p70 = scmp.ne.s32.totalorder %s53, %s69
      %p71 = scmp.eq.s32.totalorder %s33, 0
      %p72 = por %p70, %p71
      %s74 = sadd.s32 %s73, 1
      %p77 = scmp.eq.s32.totalorder %s27, 3
      %p78 = scmp.ne.s32.totalorder %s73, %s75
      %p79 = scmp.eq.s32.totalorder %s27, 0
      %p80 = por %p78, %p79
      %p81 = scmp.ne.s32.totalorder %s73, %s75
      %p82 = scmp.eq.s32.totalorder %s32, 3
      %p83 = por %p81, %p82
      %p84 = scmp.ne.s32.totalorder %s75, %s76
      %p85 = scmp.eq.s32.totalorder %s32, 0
      %p86 = por %p84, %p85
      %p87 = scmp.ne.s32.totalorder %s75, %s76
      %p88 = scmp.eq.s32.totalorder %s33, 3
      %p89 = por %p87, %p88
      %p91 = scmp.ne.s32.totalorder %s76, %s90
      %p92 = scmp.eq.s32.totalorder %s33, 0
      %p93 = por %p91, %p92
      %s95 = sadd.s32 %s94, 1
      %p98 = scmp.eq.s32.totalorder %s27, 3
      %p99 = scmp.ne.s32.totalorder %s94, %s96
      %p100 = scmp.eq.s32.totalorder %s27, 0
      %p101 = por %p99, %p100
      %p102 = scmp.ne.s32.totalorder %s94, %s96
      %p103 = scmp.eq.s32.totalorder %s32, 3
      %p104 = por %p102, %p103
      %p105 = scmp.ne.s32.totalorder %s96, %s97
      %p106 = scmp.eq.s32.totalorder %s32, 0
      %p107 = por %p105, %p106
      %p108 = scmp.ne.s32.totalorder %s96, %s97
      %p109 = scmp.eq.s32.totalorder %s33, 3
      %p110 = por %p108, %p109
      %p112 = scmp.ne.s32.totalorder %s97, %s111
      %p113 = scmp.eq.s32.totalorder %s33, 0
      %p114 = por %p112, %p113
      %s115 = ssub.s32 %s35, %s42
      %p116 = scmp.eq.s32.totalorder %s115, 0
      %s118 = sadd.s32 %s117, 1
      %s119 = scalar_select %p116, %s117, %s118
      %p122 = pneg %p116
      %p123 = scmp.eq.s32.totalorder %s27, 3
      %p124 = por %p122, %p123
      %p125 = scmp.ne.s32.totalorder %s117, %s120
      %p126 = scmp.eq.s32.totalorder %s27, 0
      %p127 = por %p125, %p126
      %p128 = scmp.ne.s32.totalorder %s117, %s120
      %p129 = scmp.eq.s32.totalorder %s32, 3
      %p130 = por %p128, %p129
      %p131 = scmp.ne.s32.totalorder %s120, %s121
      %p132 = scmp.eq.s32.totalorder %s32, 0
      %p133 = por %p131, %p132
      %p134 = scmp.ne.s32.totalorder %s120, %s121
      %p135 = scmp.eq.s32.totalorder %s33, 3
      %p136 = por %p134, %p135
      %p138 = scmp.ne.s32.totalorder %s121, %s137
      %p139 = scmp.eq.s32.totalorder %s33, 0
      %p140 = por %p138, %p139
      %s141 = ssub.s32 %s35, %s42
      %p142 = scmp.eq.s32.totalorder %s141, 0
      %s144 = sadd.s32 %s143, 1
      %s145 = scalar_select %p142, %s143, %s144
      %p148 = pneg %p142
      %p149 = scmp.eq.s32.totalorder %s27, 3
      %p150 = por %p148, %p149
      %p151 = scmp.ne.s32.totalorder %s143, %s146
      %p152 = scmp.eq.s32.totalorder %s27, 0
      %p153 = por %p151, %p152
      %p154 = scmp.ne.s32.totalorder %s143, %s146
      %p155 = scmp.eq.s32.totalorder %s32, 3
      %p156 = por %p154, %p155
      %p157 = scmp.ne.s32.totalorder %s146, %s147
      %p158 = scmp.eq.s32.totalorder %s32, 0
      %p159 = por %p157, %p158
      %p160 = scmp.ne.s32.totalorder %s146, %s147
      %p161 = scmp.eq.s32.totalorder %s33, 3
      %p162 = por %p160, %p161
      %p164 = scmp.ne.s32.totalorder %s147, %s163
      %p165 = scmp.eq.s32.totalorder %s33, 0
      %p166 = por %p164, %p165
      %s167 = ssub.s32 %s35, %s42
      %p168 = scmp.eq.s32.totalorder %s167, 0
      %s170 = sadd.s32 %s169, 1
      %s171 = scalar_select %p168, %s169, %s170
      %p174 = pneg %p168
      %p175 = scmp.eq.s32.totalorder %s27, 3
      %p176 = por %p174, %p175
      %p177 = scmp.ne.s32.totalorder %s169, %s172
      %p178 = scmp.eq.s32.totalorder %s27, 0
      %p179 = por %p177, %p178
      %p180 = scmp.ne.s32.totalorder %s169, %s172
      %p181 = scmp.eq.s32.totalorder %s32, 3
      %p182 = por %p180, %p181
      %p183 = scmp.ne.s32.totalorder %s172, %s173
      %p184 = scmp.eq.s32.totalorder %s32, 0
      %p185 = por %p183, %p184
      %p186 = scmp.ne.s32.totalorder %s172, %s173
      %p187 = scmp.eq.s32.totalorder %s33, 3
      %p188 = por %p186, %p187
      %p190 = scmp.ne.s32.totalorder %s173, %s189
      %p191 = scmp.eq.s32.totalorder %s33, 0
      %p192 = por %p190, %p191
      %s193 = ssub.s32 %s35, %s42
      %p194 = scmp.eq.s32.totalorder %s193, 0
      %s196 = sadd.s32 %s195, 1
      %s197 = scalar_select %p194, %s195, %s196
      %p200 = pneg %p194
      %p201 = scmp.eq.s32.totalorder %s27, 3
      %p202 = por %p200, %p201
      %p203 = scmp.ne.s32.totalorder %s195, %s198
      %p204 = scmp.eq.s32.totalorder %s27, 0
      %p205 = por %p203, %p204
      %p206 = scmp.ne.s32.totalorder %s195, %s198
      %p207 = scmp.eq.s32.totalorder %s32, 3
      %p208 = por %p206, %p207
      %p209 = scmp.ne.s32.totalorder %s198, %s199
      %p210 = scmp.eq.s32.totalorder %s32, 0
      %p211 = por %p209, %p210
      %p212 = scmp.ne.s32.totalorder %s198, %s199
      %p213 = scmp.eq.s32.totalorder %s33, 3
      %p214 = por %p212, %p213
      %p216 = scmp.ne.s32.totalorder %s199, %s215
      %p217 = scmp.eq.s32.totalorder %s33, 0
      %p218 = por %p216, %p217
      %s219 = ssub.s32 %s35, %s42
      %p220 = scmp.eq.s32.totalorder %s219, 0
      %s222 = sadd.s32 %s221, 1
      %s223 = scalar_select %p220, %s221, %s222
      %p226 = pneg %p220
      %p227 = scmp.eq.s32.totalorder %s27, 3
      %p228 = por %p226, %p227
      %p229 = scmp.ne.s32.totalorder %s221, %s224
      %p230 = scmp.eq.s32.totalorder %s27, 0
      %p231 = por %p229, %p230
      %p232 = scmp.ne.s32.totalorder %s221, %s224
      %p233 = scmp.eq.s32.totalorder %s32, 3
      %p234 = por %p232, %p233
      %p235 = scmp.ne.s32.totalorder %s224, %s225
      %p236 = scmp.eq.s32.totalorder %s32, 0
      %p237 = por %p235, %p236
      %p238 = scmp.ne.s32.totalorder %s224, %s225
      %p239 = scmp.eq.s32.totalorder %s33, 3
      %p240 = por %p238, %p239
      %p242 = scmp.ne.s32.totalorder %s225, %s241
      %p243 = scmp.eq.s32.totalorder %s33, 0
      %p244 = por %p242, %p243
      %s245 = ssub.s32 %s35, %s42
      %p246 = scmp.eq.s32.totalorder %s245, 0
      %s248 = sadd.s32 %s247, 1
      %s249 = scalar_select %p246, %s247, %s248
      %p252 = pneg %p246
      %p253 = scmp.eq.s32.totalorder %s27, 3
      %p254 = por %p252, %p253
      %p255 = scmp.ne.s32.totalorder %s247, %s250
      %p256 = scmp.eq.s32.totalorder %s27, 0
      %p257 = por %p255, %p256
      %p258 = scmp.ne.s32.totalorder %s247, %s250
      %p259 = scmp.eq.s32.totalorder %s32, 3
      %p260 = por %p258, %p259
      %p261 = scmp.ne.s32.totalorder %s250, %s251
      %p262 = scmp.eq.s32.totalorder %s32, 0
      %p263 = por %p261, %p262
      %p264 = scmp.ne.s32.totalorder %s250, %s251
      %p265 = scmp.eq.s32.totalorder %s33, 3
      %p266 = por %p264, %p265
      %p268 = scmp.ne.s32.totalorder %s251, %s267
      %p269 = scmp.eq.s32.totalorder %s33, 0
      %p270 = por %p268, %p269
      %s271 = ssub.s32 %s35, %s42
      %p272 = scmp.eq.s32.totalorder %s271, 0
      %s274 = sadd.s32 %s273, 1
      %s275 = scalar_select %p272, %s273, %s274
      %p278 = pneg %p272
      %p279 = scmp.eq.s32.totalorder %s27, 3
      %p280 = por %p278, %p279
      %p281 = scmp.ne.s32.totalorder %s273, %s276
      %p282 = scmp.eq.s32.totalorder %s27, 0
      %p283 = por %p281, %p282
      %p284 = scmp.ne.s32.totalorder %s273, %s276
      %p285 = scmp.eq.s32.totalorder %s32, 3
      %p286 = por %p284, %p285
      %p287 = scmp.ne.s32.totalorder %s276, %s277
      %p288 = scmp.eq.s32.totalorder %s32, 0
      %p289 = por %p287, %p288
      %p290 = scmp.ne.s32.totalorder %s276, %s277
      %p291 = scmp.eq.s32.totalorder %s33, 3
      %p292 = por %p290, %p291
      %p294 = scmp.ne.s32.totalorder %s277, %s293
      %p295 = scmp.eq.s32.totalorder %s33, 0
      %p296 = por %p294, %p295
      %s297 = ssub.s32 %s35, %s42
      %p298 = scmp.eq.s32.totalorder %s297, 0
      %s300 = sadd.s32 %s299, 1
      %s301 = scalar_select %p298, %s299, %s300
      %p304 = pneg %p298
      %p305 = scmp.eq.s32.totalorder %s27, 3
      %p306 = por %p304, %p305
      %p307 = scmp.ne.s32.totalorder %s299, %s302
      %p308 = scmp.eq.s32.totalorder %s27, 0
      %p309 = por %p307, %p308
      %p310 = scmp.ne.s32.totalorder %s299, %s302
      %p311 = scmp.eq.s32.totalorder %s32, 3
      %p312 = por %p310, %p311
      %p313 = scmp.ne.s32.totalorder %s302, %s303
      %p314 = scmp.eq.s32.totalorder %s32, 0
      %p315 = por %p313, %p314
      %p316 = scmp.ne.s32.totalorder %s302, %s303
      %p317 = scmp.eq.s32.totalorder %s33, 3
      %p318 = por %p316, %p317
      %p320 = scmp.ne.s32.totalorder %s303, %s319
      %p321 = scmp.eq.s32.totalorder %s33, 0
      %p322 = por %p320, %p321
      %s323 = ssub.s32 %s35, %s42
      %p324 = scmp.eq.s32.totalorder %s323, 0
      %s326 = sadd.s32 %s325, 1
      %s327 = scalar_select %p324, %s325, %s326
      %p330 = pneg %p324
      %p331 = scmp.eq.s32.totalorder %s27, 3
      %p332 = por %p330, %p331
      %p333 = scmp.ne.s32.totalorder %s325, %s328
      %p334 = scmp.eq.s32.totalorder %s27, 0
      %p335 = por %p333, %p334
      %p336 = scmp.ne.s32.totalorder %s325, %s328
      %p337 = scmp.eq.s32.totalorder %s32, 3
      %p338 = por %p336, %p337
      %p339 = scmp.ne.s32.totalorder %s328, %s329
      %p340 = scmp.eq.s32.totalorder %s32, 0
      %p341 = por %p339, %p340
      %p342 = scmp.ne.s32.totalorder %s328, %s329
      %p343 = scmp.eq.s32.totalorder %s33, 3
      %p344 = por %p342, %p343
      %p346 = scmp.ne.s32.totalorder %s329, %s345
      %p347 = scmp.eq.s32.totalorder %s33, 0
      %p348 = por %p346, %p347
      %s349 = ssub.s32 %s35, %s42
      %p350 = scmp.eq.s32.totalorder %s349, 0
      %s352 = sadd.s32 %s351, 1
      %s353 = scalar_select %p350, %s351, %s352
      %p356 = pneg %p350
      %p357 = scmp.eq.s32.totalorder %s27, 3
      %p358 = por %p356, %p357
      %p359 = scmp.ne.s32.totalorder %s351, %s354
      %p360 = scmp.eq.s32.totalorder %s27, 0
      %p361 = por %p359, %p360
      %p362 = scmp.ne.s32.totalorder %s351, %s354
      %p363 = scmp.eq.s32.totalorder %s32, 3
      %p364 = por %p362, %p363
      %p365 = scmp.ne.s32.totalorder %s354, %s355
      %p366 = scmp.eq.s32.totalorder %s32, 0
      %p367 = por %p365, %p366
      %p368 = scmp.ne.s32.totalorder %s354, %s355
      %p369 = scmp.eq.s32.totalorder %s33, 3
      %p370 = por %p368, %p369
      %p372 = scmp.ne.s32.totalorder %s355, %s371
      %p373 = scmp.eq.s32.totalorder %s33, 0
      %p374 = por %p372, %p373
      %s375 = ssub.s32 %s35, %s42
      %p376 = scmp.eq.s32.totalorder %s375, 0
      %s378 = sadd.s32 %s377, 1
      %s379 = scalar_select %p376, %s377, %s378
      %p382 = pneg %p376
      %p383 = scmp.eq.s32.totalorder %s27, 3
      %p384 = por %p382, %p383
      %p385 = scmp.ne.s32.totalorder %s377, %s380
      %p386 = scmp.eq.s32.totalorder %s27, 0
      %p387 = por %p385, %p386
      %p388 = scmp.ne.s32.totalorder %s377, %s380
      %p389 = scmp.eq.s32.totalorder %s32, 3
      %p390 = por %p388, %p389
      %p391 = scmp.ne.s32.totalorder %s380, %s381
      %p392 = scmp.eq.s32.totalorder %s32, 0
      %p393 = por %p391, %p392
      %p394 = scmp.ne.s32.totalorder %s380, %s381
      %p395 = scmp.eq.s32.totalorder %s33, 3
      %p396 = por %p394, %p395
      %p398 = scmp.ne.s32.totalorder %s381, %s397
      %p399 = scmp.eq.s32.totalorder %s33, 0
      %p400 = por %p398, %p399
      %s401 = ssub.s32 %s35, %s42
      %p402 = scmp.eq.s32.totalorder %s401, 0
      %s404 = sadd.s32 %s403, 1
      %s405 = scalar_select %p402, %s403, %s404
      %p408 = pneg %p402
      %p409 = scmp.eq.s32.totalorder %s27, 3
      %p410 = por %p408, %p409
      %p411 = scmp.ne.s32.totalorder %s403, %s406
      %p412 = scmp.eq.s32.totalorder %s27, 0
      %p413 = por %p411, %p412
      %p414 = scmp.ne.s32.totalorder %s403, %s406
      %p415 = scmp.eq.s32.totalorder %s32, 3
      %p416 = por %p414, %p415
      %p417 = scmp.ne.s32.totalorder %s406, %s407
      %p418 = scmp.eq.s32.totalorder %s32, 0
      %p419 = por %p417, %p418
      %p420 = scmp.ne.s32.totalorder %s406, %s407
      %p421 = scmp.eq.s32.totalorder %s33, 3
      %p422 = por %p420, %p421
      %p424 = scmp.ne.s32.totalorder %s407, %s423
      %p425 = scmp.eq.s32.totalorder %s33, 0
      %p426 = por %p424, %p425
      %s427 = ssub.s32 %s35, %s42
      %p428 = scmp.eq.s32.totalorder %s427, 0
      %s430 = sadd.s32 %s429, 1
      %s431 = scalar_select %p428, %s429, %s430
      %p434 = pneg %p428
      %p435 = scmp.eq.s32.totalorder %s27, 3
      %p436 = por %p434, %p435
      %p437 = scmp.ne.s32.totalorder %s429, %s432
      %p438 = scmp.eq.s32.totalorder %s27, 0
      %p439 = por %p437, %p438
      %p440 = scmp.ne.s32.totalorder %s429, %s432
      %p441 = scmp.eq.s32.totalorder %s32, 3
      %p442 = por %p440, %p441
      %p443 = scmp.ne.s32.totalorder %s432, %s433
      %p444 = scmp.eq.s32.totalorder %s32, 0
      %p445 = por %p443, %p444
      %p446 = scmp.ne.s32.totalorder %s432, %s433
      %p447 = scmp.eq.s32.totalorder %s33, 3
      %p448 = por %p446, %p447
      %p450 = scmp.ne.s32.totalorder %s433, %s449
      %p451 = scmp.eq.s32.totalorder %s33, 0
      %p452 = por %p450, %p451
      %s453 = ssub.s32 %s35, %s42
      %p454 = scmp.eq.s32.totalorder %s453, 0
      %s456 = sadd.s32 %s455, 1
      %s457 = scalar_select %p454, %s455, %s456
      %p460 = pneg %p454
      %p461 = scmp.eq.s32.totalorder %s27, 3
      %p462 = por %p460, %p461
      %p463 = scmp.ne.s32.totalorder %s455, %s458
      %p464 = scmp.eq.s32.totalorder %s27, 0
      %p465 = por %p463, %p464
      %p466 = scmp.ne.s32.totalorder %s455, %s458
      %p467 = scmp.eq.s32.totalorder %s32, 3
      %p468 = por %p466, %p467
      %p469 = scmp.ne.s32.totalorder %s458, %s459
      %p470 = scmp.eq.s32.totalorder %s32, 0
      %p471 = por %p469, %p470
      %p472 = scmp.ne.s32.totalorder %s458, %s459
      %p473 = scmp.eq.s32.totalorder %s33, 3
      %p474 = por %p472, %p473
      %p476 = scmp.ne.s32.totalorder %s459, %s475
      %p477 = scmp.eq.s32.totalorder %s33, 0
      %p478 = por %p476, %p477
      %s479 = ssub.s32 %s35, %s42
      %p480 = scmp.eq.s32.totalorder %s479, 0
      %s482 = sadd.s32 %s481, 1
      %s483 = scalar_select %p480, %s481, %s482
      %p486 = pneg %p480
      %p487 = scmp.eq.s32.totalorder %s27, 3
      %p488 = por %p486, %p487
      %p489 = scmp.ne.s32.totalorder %s481, %s484
      %p490 = scmp.eq.s32.totalorder %s27, 0
      %p491 = por %p489, %p490
      %p492 = scmp.ne.s32.totalorder %s481, %s484
      %p493 = scmp.eq.s32.totalorder %s32, 3
      %p494 = por %p492, %p493
      %p495 = scmp.ne.s32.totalorder %s484, %s485
      %p496 = scmp.eq.s32.totalorder %s32, 0
      %p497 = por %p495, %p496
      %p498 = scmp.ne.s32.totalorder %s484, %s485
      %p499 = scmp.eq.s32.totalorder %s33, 3
      %p500 = por %p498, %p499
      %p502 = scmp.ne.s32.totalorder %s485, %s501
      %p503 = scmp.eq.s32.totalorder %s33, 0
      %p504 = por %p502, %p503
      %s505 = ssub.s32 %s34, %s46
      %p506 = scmp.eq.s32.totalorder %s505, 0
      %s508 = sadd.s32 %s507, 1
      %s509 = scalar_select %p506, %s507, %s508
      %p512 = pneg %p506
      %p513 = scmp.eq.s32.totalorder %s27, 3
      %p514 = por %p512, %p513
      %p515 = scmp.ne.s32.totalorder %s507, %s510
      %p516 = scmp.eq.s32.totalorder %s27, 0
      %p517 = por %p515, %p516
      %p518 = scmp.ne.s32.totalorder %s507, %s510
      %p519 = scmp.eq.s32.totalorder %s32, 3
      %p520 = por %p518, %p519
      %p521 = scmp.ne.s32.totalorder %s510, %s511
      %p522 = scmp.eq.s32.totalorder %s32, 0
      %p523 = por %p521, %p522
      %p524 = scmp.ne.s32.totalorder %s510, %s511
      %p525 = scmp.eq.s32.totalorder %s33, 3
      %p526 = por %p524, %p525
      %p528 = scmp.ne.s32.totalorder %s511, %s527
      %p529 = scmp.eq.s32.totalorder %s33, 0
      %p530 = por %p528, %p529
      %p531 = scmp.le.s32.totalorder 1, %s27
      %p532 = scmp.lt.s32.totalorder %s27, 5
      %p533 = pnand %p531, %p532
      %p534 = pneg %p533
      // Predicated region
      $region9: #{tpu_custom_call.1} parent=5 // pred_check
        _
      $region10: #{tpu_custom_call.1} parent=5 // pred_check_branch
        %536 = sbr.rel (%p533) target = $region12
      $region11: #{tpu_custom_call.1} parent=5 // pred_region
        %s537 = ssub.s32 %s27, 1
        // Predicated region
        $region13: #{tpu_custom_call.1} parent=11 // pred_check
          %p538 = pneg %p86
        $region14: #{tpu_custom_call.1} parent=11 // pred_check_branch
          %540 = sbr.rel (%p538) target = $region16
        $region15: #{tpu_custom_call.1} parent=11 // pred_region
          _
        $region16: #{tpu_custom_call.1} parent=11 // pred_fallthru
          _
        // Predicated region
        $region17: #{tpu_custom_call.1} parent=11 // pred_check
          %p541 = pneg %p107
        $region18: #{tpu_custom_call.1} parent=11 // pred_check_branch
          %543 = sbr.rel (%p541) target = $region20
        $region19: #{tpu_custom_call.1} parent=11 // pred_region
          _
        $region20: #{tpu_custom_call.1} parent=11 // pred_fallthru
          _
      $region12: #{tpu_custom_call.1} parent=5 // pred_fallthru
        _
      %p544 = scmp.lt.s32.totalorder %s27, 4
      // Predicated region
      $region21: #{tpu_custom_call.1} parent=5 // pred_check
        %p545 = pneg %p544
      $region22: #{tpu_custom_call.1} parent=5 // pred_check_branch
        %547 = sbr.rel (%p545) target = $region24
      $region23: #{tpu_custom_call.1} parent=5 // pred_region
        // Predicated region
        $region25: #{tpu_custom_call.1} parent=23 // pred_check
          %p548 = pneg %p59
        $region26: #{tpu_custom_call.1} parent=23 // pred_check_branch
          %550 = sbr.rel (%p548) target = $region28
        $region27: #{tpu_custom_call.1} parent=23 // pred_region
          %p551 = scmp.lt.s32.totalorder %s34, 1
          %s552 = scalar_select %p551, %s34, 1
          %s553 = smul.addr %s552, 8
          %s554 = scalar_lea.vmem %s0, %s553
        $region28: #{tpu_custom_call.1} parent=23 // pred_fallthru
          _
        // Predicated region
        $region29: #{tpu_custom_call.1} parent=23 // pred_check
          %p555 = pneg %p127
        $region30: #{tpu_custom_call.1} parent=23 // pred_check_branch
          %557 = sbr.rel (%p555) target = $region32
        $region31: #{tpu_custom_call.1} parent=23 // pred_region
          %p558 = scmp.lt.s32.totalorder %s35, 1
          %s559 = scalar_select %p558, %s35, 1
          %s560 = scalar_lea.vmem %s3, %s559
        $region32: #{tpu_custom_call.1} parent=23 // pred_fallthru
          _
        // Predicated region
        $region33: #{tpu_custom_call.1} parent=23 // pred_check
          %p561 = pneg %p153
        $region34: #{tpu_custom_call.1} parent=23 // pred_check_branch
          %563 = sbr.rel (%p561) target = $region36
        $region35: #{tpu_custom_call.1} parent=23 // pred_region
          %p564 = scmp.lt.s32.totalorder %s35, 1
          %s565 = scalar_select %p564, %s35, 1
          %s566 = scalar_lea.vmem %s4, %s565
        $region36: #{tpu_custom_call.1} parent=23 // pred_fallthru
          _
        // Predicated region
        $region37: #{tpu_custom_call.1} parent=23 // pred_check
          %p567 = pneg %p179
        $region38: #{tpu_custom_call.1} parent=23 // pred_check_branch
          %569 = sbr.rel (%p567) target = $region40
        $region39: #{tpu_custom_call.1} parent=23 // pred_region
          %p570 = scmp.lt.s32.totalorder %s35, 1
          %s571 = scalar_select %p570, %s35, 1
          %s572 = scalar_lea.vmem %s5, %s571
        $region40: #{tpu_custom_call.1} parent=23 // pred_fallthru
          _
        // Predicated region
        $region41: #{tpu_custom_call.1} parent=23 // pred_check
          %p573 = pneg %p205
        $region42: #{tpu_custom_call.1} parent=23 // pred_check_branch
          %575 = sbr.rel (%p573) target = $region44
        $region43: #{tpu_custom_call.1} parent=23 // pred_region
          %p576 = scmp.lt.s32.totalorder %s35, 1
          %s577 = scalar_select %p576, %s35, 1
          %s578 = scalar_lea.vmem %s6, %s577
        $region44: #{tpu_custom_call.1} parent=23 // pred_fallthru
          _
        // Predicated region
        $region45: #{tpu_custom_call.1} parent=23 // pred_check
          %p579 = pneg %p231
        $region46: #{tpu_custom_call.1} parent=23 // pred_check_branch
          %581 = sbr.rel (%p579) target = $region48
        $region47: #{tpu_custom_call.1} parent=23 // pred_region
          %p582 = scmp.lt.s32.totalorder %s35, 1
          %s583 = scalar_select %p582, %s35, 1
          %s584 = smul.addr %s583, 4
          %s585 = smul.addr %s584, 4
          %s586 = scalar_lea.vmem %s7, %s585
        $region48: #{tpu_custom_call.1} parent=23 // pred_fallthru
          _
        // Predicated region
        $region49: #{tpu_custom_call.1} parent=23 // pred_check
          %p587 = pneg %p257
        $region50: #{tpu_custom_call.1} parent=23 // pred_check_branch
          %589 = sbr.rel (%p587) target = $region52
        $region51: #{tpu_custom_call.1} parent=23 // pred_region
          %p590 = scmp.lt.s32.totalorder %s35, 1
          %s591 = scalar_select %p590, %s35, 1
          %s592 = smul.addr %s591, 4
          %s593 = smul.addr %s592, 4
          %s594 = scalar_lea.vmem %s8, %s593
        $region52: #{tpu_custom_call.1} parent=23 // pred_fallthru
          _
        // Predicated region
        $region53: #{tpu_custom_call.1} parent=23 // pred_check
          %p595 = pneg %p283
        $region54: #{tpu_custom_call.1} parent=23 // pred_check_branch
          %597 = sbr.rel (%p595) target = $region56
        $region55: #{tpu_custom_call.1} parent=23 // pred_region
          %p598 = scmp.lt.s32.totalorder %s35, 1
          %s599 = scalar_select %p598, %s35, 1
          %s600 = smul.addr %s599, 4
          %s601 = smul.addr %s600, 4
          %s602 = scalar_lea.vmem %s9, %s601
        $region56: #{tpu_custom_call.1} parent=23 // pred_fallthru
          _
        // Predicated region
        $region57: #{tpu_custom_call.1} parent=23 // pred_check
          %p603 = pneg %p309
        $region58: #{tpu_custom_call.1} parent=23 // pred_check_branch
          %605 = sbr.rel (%p603) target = $region60
        $region59: #{tpu_custom_call.1} parent=23 // pred_region
          %p606 = scmp.lt.s32.totalorder %s35, 1
          %s607 = scalar_select %p606, %s35, 1
          %s608 = scalar_lea.vmem %s10, %s607
        $region60: #{tpu_custom_call.1} parent=23 // pred_fallthru
          _
        // Predicated region
        $region61: #{tpu_custom_call.1} parent=23 // pred_check
          %p609 = pneg %p335
        $region62: #{tpu_custom_call.1} parent=23 // pred_check_branch
          %611 = sbr.rel (%p609) target = $region64
        $region63: #{tpu_custom_call.1} parent=23 // pred_region
          %p612 = scmp.lt.s32.totalorder %s35, 1
          %s613 = scalar_select %p612, %s35, 1
          %s614 = scalar_lea.vmem %s11, %s613
        $region64: #{tpu_custom_call.1} parent=23 // pred_fallthru
          _
        // Predicated region
        $region65: #{tpu_custom_call.1} parent=23 // pred_check
          %p615 = pneg %p361
        $region66: #{tpu_custom_call.1} parent=23 // pred_check_branch
          %617 = sbr.rel (%p615) target = $region68
        $region67: #{tpu_custom_call.1} parent=23 // pred_region
          %p618 = scmp.lt.s32.totalorder %s35, 1
          %s619 = scalar_select %p618, %s35, 1
          %s620 = scalar_lea.vmem %s12, %s619
        $region68: #{tpu_custom_call.1} parent=23 // pred_fallthru
          _
        // Predicated region
        $region69: #{tpu_custom_call.1} parent=23 // pred_check
          %p621 = pneg %p387
        $region70: #{tpu_custom_call.1} parent=23 // pred_check_branch
          %623 = sbr.rel (%p621) target = $region72
        $region71: #{tpu_custom_call.1} parent=23 // pred_region
          %p624 = scmp.lt.s32.totalorder %s35, 1
          %s625 = scalar_select %p624, %s35, 1
          %s626 = scalar_lea.vmem %s13, %s625
        $region72: #{tpu_custom_call.1} parent=23 // pred_fallthru
          _
        // Predicated region
        $region73: #{tpu_custom_call.1} parent=23 // pred_check
          %p627 = pneg %p413
        $region74: #{tpu_custom_call.1} parent=23 // pred_check_branch
          %629 = sbr.rel (%p627) target = $region76
        $region75: #{tpu_custom_call.1} parent=23 // pred_region
          %p630 = scmp.lt.s32.totalorder %s35, 1
          %s631 = scalar_select %p630, %s35, 1
          %s632 = smul.addr %s631, 4
          %s633 = smul.addr %s632, 4
          %s634 = scalar_lea.vmem %s14, %s633
        $region76: #{tpu_custom_call.1} parent=23 // pred_fallthru
          _
        // Predicated region
        $region77: #{tpu_custom_call.1} parent=23 // pred_check
          %p635 = pneg %p439
        $region78: #{tpu_custom_call.1} parent=23 // pred_check_branch
          %637 = sbr.rel (%p635) target = $region80
        $region79: #{tpu_custom_call.1} parent=23 // pred_region
          %p638 = scmp.lt.s32.totalorder %s35, 1
          %s639 = scalar_select %p638, %s35, 1
          %s640 = scalar_lea.vmem %s15, %s639
        $region80: #{tpu_custom_call.1} parent=23 // pred_fallthru
          _
        // Predicated region
        $region81: #{tpu_custom_call.1} parent=23 // pred_check
          %p641 = pneg %p465
        $region82: #{tpu_custom_call.1} parent=23 // pred_check_branch
          %643 = sbr.rel (%p641) target = $region84
        $region83: #{tpu_custom_call.1} parent=23 // pred_region
          %p644 = scmp.lt.s32.totalorder %s35, 1
          %s645 = scalar_select %p644, %s35, 1
          %s646 = smul.addr %s645, 16
          %s647 = smul.addr %s646, 4
          %s648 = scalar_lea.vmem %s16, %s647
        $region84: #{tpu_custom_call.1} parent=23 // pred_fallthru
          _
        // Predicated region
        $region85: #{tpu_custom_call.1} parent=23 // pred_check
          %p649 = pneg %p491
        $region86: #{tpu_custom_call.1} parent=23 // pred_check_branch
          %651 = sbr.rel (%p649) target = $region88
        $region87: #{tpu_custom_call.1} parent=23 // pred_region
          %p652 = scmp.lt.s32.totalorder %s35, 1
          %s653 = scalar_select %p652, %s35, 1
          %s654 = scalar_lea.vmem %s17, %s653
        $region88: #{tpu_custom_call.1} parent=23 // pred_fallthru
          _
      $region24: #{tpu_custom_call.1} parent=5 // pred_fallthru
        _
      %p655 = scmp.le.s32.totalorder 1, %s27
      %p656 = scmp.lt.s32.totalorder %s27, 5
      %p657 = pnand %p655, %p656
      %p658 = pneg %p657
      // Predicated region
      $region89: #{tpu_custom_call.1} parent=5 // pred_check
        _
      $region90: #{tpu_custom_call.1} parent=5 // pred_check_branch
        %660 = sbr.rel (%p657) target = $region92
      $region91: #{tpu_custom_call.1} parent=5 // pred_region
        %s661 = ssub.s32 %s27, 1
        %p662 = scmp.lt.s32.totalorder %s36, 1
        %s663 = scalar_select %p662, %s36, 1
        %s664 = smul.addr %s663, 8
        %s665 = scalar_lea.vmem %s0, %s664
        %p666 = pneg %p65
        %p667 = pneg %p62
        %p668 = pneg %p86
        %p669 = pneg %p83
        %p670 = pneg %p107
        %p671 = pneg %p104
        %p672 = scmp.lt.s32.totalorder %s37, 1
        %s673 = scalar_select %p672, %s37, 1
        %s674 = scalar_lea.vmem %s3, %s673
        %p675 = pneg %p133
        %p676 = pneg %p130
        %p677 = scmp.lt.s32.totalorder %s37, 1
        %s678 = scalar_select %p677, %s37, 1
        %s679 = scalar_lea.vmem %s4, %s678
        %p680 = pneg %p159
        %p681 = pneg %p156
        %p682 = scmp.lt.s32.totalorder %s37, 1
        %s683 = scalar_select %p682, %s37, 1
        %s684 = scalar_lea.vmem %s5, %s683
        %p685 = pneg %p185
        %p686 = pneg %p182
        %p687 = scmp.lt.s32.totalorder %s37, 1
        %s688 = scalar_select %p687, %s37, 1
        %s689 = scalar_lea.vmem %s6, %s688
        %p690 = pneg %p211
        %p691 = pneg %p208
        %p692 = scmp.lt.s32.totalorder %s37, 1
        %s693 = scalar_select %p692, %s37, 1
        %s694 = smul.addr %s693, 4
        %s695 = smul.addr %s694, 4
        %s696 = scalar_lea.vmem %s7, %s695
        %p697 = pneg %p237
        %p698 = pneg %p234
        %p699 = scmp.lt.s32.totalorder %s37, 1
        %s700 = scalar_select %p699, %s37, 1
        %s701 = smul.addr %s700, 4
        %s702 = smul.addr %s701, 4
        %s703 = scalar_lea.vmem %s8, %s702
        %p704 = pneg %p263
        %p705 = pneg %p260
        %p706 = scmp.lt.s32.totalorder %s37, 1
        %s707 = scalar_select %p706, %s37, 1
        %s708 = smul.addr %s707, 4
        %s709 = smul.addr %s708, 4
        %s710 = scalar_lea.vmem %s9, %s709
        %p711 = pneg %p289
        %p712 = pneg %p286
        %p713 = scmp.lt.s32.totalorder %s37, 1
        %s714 = scalar_select %p713, %s37, 1
        %s715 = scalar_lea.vmem %s10, %s714
        %p716 = pneg %p315
        %p717 = pneg %p312
        %p718 = scmp.lt.s32.totalorder %s37, 1
        %s719 = scalar_select %p718, %s37, 1
        %s720 = scalar_lea.vmem %s11, %s719
        %p721 = pneg %p341
        %p722 = pneg %p338
        %p723 = scmp.lt.s32.totalorder %s37, 1
        %s724 = scalar_select %p723, %s37, 1
        %s725 = scalar_lea.vmem %s12, %s724
        %p726 = pneg %p367
        %p727 = pneg %p364
        %p728 = scmp.lt.s32.totalorder %s37, 1
        %s729 = scalar_select %p728, %s37, 1
        %s730 = scalar_lea.vmem %s13, %s729
        %p731 = pneg %p393
        %p732 = pneg %p390
        %p733 = scmp.lt.s32.totalorder %s37, 1
        %s734 = scalar_select %p733, %s37, 1
        %s735 = smul.addr %s734, 4
        %s736 = smul.addr %s735, 4
        %s737 = scalar_lea.vmem %s14, %s736
        %p738 = pneg %p419
        %p739 = pneg %p416
        %p740 = scmp.lt.s32.totalorder %s37, 1
        %s741 = scalar_select %p740, %s37, 1
        %s742 = scalar_lea.vmem %s15, %s741
        %p743 = pneg %p445
        %p744 = pneg %p442
        %p745 = scmp.lt.s32.totalorder %s37, 1
        %s746 = scalar_select %p745, %s37, 1
        %s747 = smul.addr %s746, 16
        %s748 = smul.addr %s747, 4
        %s749 = scalar_lea.vmem %s16, %s748
        %p750 = pneg %p471
        %p751 = pneg %p468
        %p752 = scmp.lt.s32.totalorder %s37, 1
        %s753 = scalar_select %p752, %s37, 1
        %s754 = scalar_lea.vmem %s17, %s753
        %p755 = pneg %p497
        %p756 = pneg %p494
        %p757 = pneg %p523
        %p758 = pneg %p520
        %s759 = sand.u32 %s510, 1
        %s760 = scalar_lea.sflag [#allocation4], %s759
        %s761 = sand.u32 %s510, 1
        %s762 = smul.addr %s761, 8
        %s763 = scalar_lea.vmem [#allocation3], %s762
        %p764 = scmp.lt.s32.totalorder %s36, 1
        %s765 = scalar_select %p764, %s36, 1
        %s766 = smul.addr %s765, 8
        %s767 = scalar_lea.vmem %s0, %s766
        %p768 = scmp.lt.s32.totalorder %s37, 1
        %s769 = scalar_select %p768, %s37, 1
        %s770 = scalar_lea.vmem %s3, %s769
        %p771 = scmp.lt.s32.totalorder %s37, 1
        %s772 = scalar_select %p771, %s37, 1
        %s773 = scalar_lea.vmem %s4, %s772
        %p774 = scmp.lt.s32.totalorder %s37, 1
        %s775 = scalar_select %p774, %s37, 1
        %s776 = scalar_lea.vmem %s5, %s775
        %p777 = scmp.lt.s32.totalorder %s37, 1
        %s778 = scalar_select %p777, %s37, 1
        %s779 = scalar_lea.vmem %s6, %s778
        %p780 = scmp.lt.s32.totalorder %s37, 1
        %s781 = scalar_select %p780, %s37, 1
        %s782 = smul.addr %s781, 4
        %s783 = smul.addr %s782, 4
        %s784 = scalar_lea.vmem %s7, %s783
        %p785 = scmp.lt.s32.totalorder %s37, 1
        %s786 = scalar_select %p785, %s37, 1
        %s787 = smul.addr %s786, 4
        %s788 = smul.addr %s787, 4
        %s789 = scalar_lea.vmem %s8, %s788
        %p790 = scmp.lt.s32.totalorder %s37, 1
        %s791 = scalar_select %p790, %s37, 1
        %s792 = smul.addr %s791, 4
        %s793 = smul.addr %s792, 4
        %s794 = scalar_lea.vmem %s9, %s793
        %p795 = scmp.lt.s32.totalorder %s37, 1
        %s796 = scalar_select %p795, %s37, 1
        %s797 = scalar_lea.vmem %s10, %s796
        %p798 = scmp.lt.s32.totalorder %s37, 1
        %s799 = scalar_select %p798, %s37, 1
        %s800 = scalar_lea.vmem %s11, %s799
        %p801 = scmp.lt.s32.totalorder %s37, 1
        %s802 = scalar_select %p801, %s37, 1
        %s803 = scalar_lea.vmem %s12, %s802
        %p804 = scmp.lt.s32.totalorder %s37, 1
        %s805 = scalar_select %p804, %s37, 1
        %s806 = scalar_lea.vmem %s13, %s805
        %p807 = scmp.lt.s32.totalorder %s37, 1
        %s808 = scalar_select %p807, %s37, 1
        %s809 = smul.addr %s808, 4
        %s810 = smul.addr %s809, 4
        %s811 = scalar_lea.vmem %s14, %s810
        %p812 = scmp.lt.s32.totalorder %s37, 1
        %s813 = scalar_select %p812, %s37, 1
        %s814 = scalar_lea.vmem %s15, %s813
        %p815 = scmp.lt.s32.totalorder %s37, 1
        %s816 = scalar_select %p815, %s37, 1
        %s817 = smul.addr %s816, 16
        %s818 = smul.addr %s817, 4
        %s819 = scalar_lea.vmem %s16, %s818
        %p820 = scmp.lt.s32.totalorder %s37, 1
        %s821 = scalar_select %p820, %s37, 1
        %s822 = scalar_lea.vmem %s17, %s821
        %p824 = scmp.eq.s32.totalorder %s37, 0
        // Predicated region
        $region93: #{tpu_custom_call.1} parent=91 // pred_check
          %p825 = pneg %p824
        $region94: #{tpu_custom_call.1} parent=91 // pred_check_branch
          %827 = sbr.rel (%p825) target = $region96
        $region95: #{tpu_custom_call.1} parent=91 // pred_region
          %v828 = vld [vmem:[%s767] sm:$0xff]
          %v829 = vpack.c.bf16 %v828, %v828
          %v830 = vld [vmem:[%s1] sm:$0xf]
          %v831 = vld [vmem:[%s1 + $0x4] sm:$0xf]
          %v832 = vld [vmem:[%s2] sm:$0x1]
          %v834 = vlaneseq
          %v835 = vshrl.u32 %v834, 7
          %v836 = vsub.s32 0, %v835
          %v837 = vrot.slane %v832, %v836
          %v841 = vunpack.c.l.b16 %v830
          %v842 = vunpack.c.l.b16 %v831
          %v843 = vpack.c.b16 %v842, %v841
          %vm845 = vcmask 130048
          %v847 = vsel %vm845, %v829, 0
          %849 = vmatprep.subr.bf16.mxu0 0
          %850 = vmatpush1.bf16.msra.mxu0 0
          %851 = vmatprep.subr.bf16.mxu0 0
          %852 = vmatpush1.bf16.msra.mxu0 0
          %853 = vmatprep.subr.bf16.mxu0 0
          %854 = vmatpush1.bf16.msra.mxu0 0
          %855 = vmatprep.subr.bf16.mxu0 0
          %856 = vmatpush1.bf16.msra.mxu0 0
          %857 = vmatprep.subr.bf16.mxu0 0
          %858 = vmatpush1.bf16.msra.mxu0 0
          %859 = vmatprep.subr.bf16.mxu0 0
          %860 = vmatpush1.bf16.msra.mxu0 0
          %861 = vmatprep.subr.bf16.mxu0 0
          %862 = vmatpush1.bf16.msra.mxu0 0
          %863 = vmatprep.subr.bf16.mxu0 0
          %864 = vmatpush1.bf16.msra.mxu0 %v843
          %865 = vmatprep.subr.bf16.mxu0 0
          %866 = vmatpush2.bf16.msra.mxu0 0
          %867 = vmatprep.subr.bf16.mxu0 0
          %868 = vmatpush2.bf16.msra.mxu0 0
          %869 = vmatprep.subr.bf16.mxu0 0
          %870 = vmatpush2.bf16.msra.mxu0 0
          %871 = vmatprep.subr.bf16.mxu0 0
          %872 = vmatpush2.bf16.msra.mxu0 0
          %873 = vmatprep.subr.bf16.mxu0 0
          %874 = vmatpush2.bf16.msra.mxu0 0
          %875 = vmatprep.subr.bf16.mxu0 0
          %876 = vmatpush2.bf16.msra.mxu0 0
          %877 = vmatprep.subr.bf16.mxu0 0
          %878 = vmatpush2.bf16.msra.mxu0 0
          %879 = vmatprep.subr.bf16.mxu0 0
          %880 = vmatpush2.bf16.msra.mxu0 0
          %881 = vmatprep.mubr.bf16.mxu0 0
          %882 = vmatmul.mubr.bf16.gmra.mxu0 %v847
          %v883 = vpop.f32.mrf.mxu0
          %v884 = vadd.f32 %v837, %v883
          %v885 = vpop.f32.mrf.mxu0
          %v886 = vpop.f32.mrf.mxu0
          %v887 = vpop.f32.mrf.mxu0
          %888 = vdwg.mxu0
          %vm889 = vcmask 261120
          %890 = vst.msk [vmem:[#allocation2] sm:$0xff] %vm889, %v884
        $region96: #{tpu_custom_call.1} parent=91 // pred_fallthru
          _
        %v891 = vld [vmem:[#allocation2] sm:$0xff]
        %vm892 = vcmask 261120
        %v893 = vsel %vm892, %v891, 0.0
        %894 = vadd.xlane.f32.xlu0 %v893
        %v895 = vpop.xlane.xlu0 %894
        %v896 = vrcp.pop 32.0
        %v897 = vmul.f32 %v895, %v896
        %v898 = vsub.f32 %v891, %v897
        %v899 = vmul.f32 %v898, %v898
        %v900 = vsel %vm892, %v899, 0.0
        %901 = vadd.xlane.f32.xlu0 %v900
        %v902 = vpop.xlane.xlu0 %901
        %v903 = vmul.f32 %v902, %v896
        %v904 = vadd.f32 %v903, 1e-05
        %v905 = vrsqrt.pop %v904
        %v906 = vmul.f32 %v898, %v905
        %v907 = vld [vmem:[%s770] sm:$0x1]
        %v909 = vlaneseq
        %v910 = vshrl.u32 %v909, 7
        %v911 = vsub.s32 0, %v910
        %v912 = vrot.slane %v907, %v911
        %v914 = vmul.f32 %v906, %v912
        %v915 = vld [vmem:[%s773] sm:$0x1]
        %v917 = vlaneseq
        %v918 = vshrl.u32 %v917, 7
        %v919 = vsub.s32 0, %v918
        %v920 = vrot.slane %v915, %v919
        %v922 = vadd.f32 %v914, %v920
        %v923 = vsel %vm892, %v922, 0.0
        %924 = vadd.xlane.f32.xlu0 %v923
        %v925 = vpop.xlane.xlu0 %924
        %v926 = vmul.f32 %v925, %v896
        %v927 = vsub.f32 %v922, %v926
        %v928 = vmul.f32 %v927, %v927
        %v929 = vsel %vm892, %v928, 0.0
        %930 = vadd.xlane.f32.xlu0 %v929
        %v931 = vpop.xlane.xlu0 %930
        %v932 = vmul.f32 %v931, %v896
        %v933 = vadd.f32 %v932, 1e-05
        %v934 = vrsqrt.pop %v933
        %v935 = vmul.f32 %v927, %v934
        %v936 = vld [vmem:[%s776] sm:$0x1]
        %v938 = vlaneseq
        %v939 = vshrl.u32 %v938, 7
        %v940 = vsub.s32 0, %v939
        %v941 = vrot.slane %v936, %v940
        %v943 = vmul.f32 %v935, %v941
        %v944 = vld [vmem:[%s779] sm:$0x1]
        %v946 = vlaneseq
        %v947 = vshrl.u32 %v946, 7
        %v948 = vsub.s32 0, %v947
        %v949 = vrot.slane %v944, %v948
        %v951 = vadd.f32 %v943, %v949
        %v952 = vpack.c.bf16 %v951, %v951
        %v953 = vld [vmem:[%s784] sm:$0xf]
        %v954 = vld [vmem:[%s784 + $0x4] sm:$0xf]
        %v955 = vld [vmem:[%s784 + $0x8] sm:$0xf]
        %v956 = vld [vmem:[%s784 + $0xc] sm:$0xf]
        %v961 = vunpack.c.l.b16 %v953
        %v962 = vunpack.c.l.b16 %v954
        %v963 = vunpack.c.l.b16 %v955
        %v964 = vunpack.c.l.b16 %v956
        %v965 = vpack.c.b16 %v962, %v961
        %v966 = vpack.c.b16 %v964, %v963
        %v970 = vsel %vm892, %v952, 0
        %972 = vmatprep.subr.bf16.mxu0 0
        %973 = vmatpush1.bf16.msra.mxu0 0
        %974 = vmatprep.subr.bf16.mxu0 0
        %975 = vmatpush1.bf16.msra.mxu0 0
        %976 = vmatprep.subr.bf16.mxu0 0
        %977 = vmatpush1.bf16.msra.mxu0 0
        %978 = vmatprep.subr.bf16.mxu0 0
        %979 = vmatpush1.bf16.msra.mxu0 0
        %980 = vmatprep.subr.bf16.mxu0 0
        %981 = vmatpush1.bf16.msra.mxu0 0
        %982 = vmatprep.subr.bf16.mxu0 0
        %983 = vmatpush1.bf16.msra.mxu0 0
        %984 = vmatprep.subr.bf16.mxu0 0
        %985 = vmatpush1.bf16.msra.mxu0 %v966
        %986 = vmatprep.subr.bf16.mxu0 0
        %987 = vmatpush1.bf16.msra.mxu0 %v965
        %988 = vmatprep.subr.bf16.mxu0 0
        %989 = vmatpush2.bf16.msra.mxu0 0
        %990 = vmatprep.subr.bf16.mxu0 0
        %991 = vmatpush2.bf16.msra.mxu0 0
        %992 = vmatprep.subr.bf16.mxu0 0
        %993 = vmatpush2.bf16.msra.mxu0 0
        %994 = vmatprep.subr.bf16.mxu0 0
        %995 = vmatpush2.bf16.msra.mxu0 0
        %996 = vmatprep.subr.bf16.mxu0 0
        %997 = vmatpush2.bf16.msra.mxu0 0
        %998 = vmatprep.subr.bf16.mxu0 0
        %999 = vmatpush2.bf16.msra.mxu0 0
        %1000 = vmatprep.subr.bf16.mxu0 0
        %1001 = vmatpush2.bf16.msra.mxu0 0
        %1002 = vmatprep.subr.bf16.mxu0 0
        %1003 = vmatpush2.bf16.msra.mxu0 0
        %1004 = vmatprep.mubr.bf16.mxu0 0
        %1005 = vmatmul.mubr.bf16.gmra.mxu0 %v970
        %v1006 = vpop.f32.mrf.mxu0
        %v1007 = vadd.f32 0.0, %v1006
        %v1008 = vpop.f32.mrf.mxu0
        %v1009 = vpop.f32.mrf.mxu0
        %v1010 = vpop.f32.mrf.mxu0
        %1011 = vdwg.mxu0
        %v1012 = vld [vmem:[%s789] sm:$0xf]
        %v1013 = vld [vmem:[%s789 + $0x4] sm:$0xf]
        %v1014 = vld [vmem:[%s789 + $0x8] sm:$0xf]
        %v1015 = vld [vmem:[%s789 + $0xc] sm:$0xf]
        %v1020 = vunpack.c.l.b16 %v1012
        %v1021 = vunpack.c.l.b16 %v1013
        %v1022 = vunpack.c.l.b16 %v1014
        %v1023 = vunpack.c.l.b16 %v1015
        %v1024 = vpack.c.b16 %v1021, %v1020
        %v1025 = vpack.c.b16 %v1023, %v1022
        %1028 = vmatprep.subr.bf16.mxu0 0
        %1029 = vmatpush1.bf16.msra.mxu0 0
        %1030 = vmatprep.subr.bf16.mxu0 0
        %1031 = vmatpush1.bf16.msra.mxu0 0
        %1032 = vmatprep.subr.bf16.mxu0 0
        %1033 = vmatpush1.bf16.msra.mxu0 0
        %1034 = vmatprep.subr.bf16.mxu0 0
        %1035 = vmatpush1.bf16.msra.mxu0 0
        %1036 = vmatprep.subr.bf16.mxu0 0
        %1037 = vmatpush1.bf16.msra.mxu0 0
        %1038 = vmatprep.subr.bf16.mxu0 0
        %1039 = vmatpush1.bf16.msra.mxu0 0
        %1040 = vmatprep.subr.bf16.mxu0 0
        %1041 = vmatpush1.bf16.msra.mxu0 %v1025
        %1042 = vmatprep.subr.bf16.mxu0 0
        %1043 = vmatpush1.bf16.msra.mxu0 %v1024
        %1044 = vmatprep.subr.bf16.mxu0 0
        %1045 = vmatpush2.bf16.msra.mxu0 0
        %1046 = vmatprep.subr.bf16.mxu0 0
        %1047 = vmatpush2.bf16.msra.mxu0 0
        %1048 = vmatprep.subr.bf16.mxu0 0
        %1049 = vmatpush2.bf16.msra.mxu0 0
        %1050 = vmatprep.subr.bf16.mxu0 0
        %1051 = vmatpush2.bf16.msra.mxu0 0
        %1052 = vmatprep.subr.bf16.mxu0 0
        %1053 = vmatpush2.bf16.msra.mxu0 0
        %1054 = vmatprep.subr.bf16.mxu0 0
        %1055 = vmatpush2.bf16.msra.mxu0 0
        %1056 = vmatprep.subr.bf16.mxu0 0
        %1057 = vmatpush2.bf16.msra.mxu0 0
        %1058 = vmatprep.subr.bf16.mxu0 0
        %1059 = vmatpush2.bf16.msra.mxu0 0
        %1060 = vmatprep.mubr.bf16.mxu0 0
        %1061 = vmatmul.mubr.bf16.gmra.mxu0 %v970
        %v1062 = vpop.f32.mrf.mxu0
        %v1063 = vadd.f32 0.0, %v1062
        %v1064 = vpop.f32.mrf.mxu0
        %v1065 = vpop.f32.mrf.mxu0
        %v1066 = vpop.f32.mrf.mxu0
        %1067 = vdwg.mxu0
        %v1068 = vmul.f32 %v1007, 0.2102241
        %v1069 = vmul.f32 %v1063, 0.59460354
        %1071 = vrot.lane.b32.xlu0 %v1068, 120
        %v1072 = vpop.permute.xlu0 %1071
        %1074 = vrot.lane.b32.xlu0 %v1068, 112
        %v1075 = vpop.permute.xlu0 %1074
        %1077 = vrot.lane.b32.xlu0 %v1068, 104
        %v1078 = vpop.permute.xlu0 %1077
        %v1080 = vpack.c.bf16 %v1072, %v1068
        %v1081 = vpack.c.bf16 %v1078, %v1075
        %v1082 = vpack.c.bf16 %v1069, %v1069
        %vm1083 = vcmask 64512
        %v1085 = vsel %vm1083, %v1080, 0
        %v1088 = vsel %vm1083, %v1081, 0
        %v1091 = vsel %vm1083, %v1082, 0
        %1093 = vmatprep.subr.bf16.mxu0 0
        %1094 = vmatpush1.bf16.xpose.msra.mxu0 0
        %1095 = vmatprep.subr.bf16.mxu0 0
        %1096 = vmatpush1.bf16.xpose.msra.mxu0 0
        %1097 = vmatprep.subr.bf16.mxu0 0
        %1098 = vmatpush1.bf16.xpose.msra.mxu0 0
        %1099 = vmatprep.subr.bf16.mxu0 0
        %1100 = vmatpush1.bf16.xpose.msra.mxu0 0
        %1101 = vmatprep.subr.bf16.mxu0 0
        %1102 = vmatpush1.bf16.xpose.msra.mxu0 0
        %1103 = vmatprep.subr.bf16.mxu0 0
        %1104 = vmatpush1.bf16.xpose.msra.mxu0 0
        %1105 = vmatprep.subr.bf16.mxu0 0
        %1106 = vmatpush1.bf16.xpose.msra.mxu0 0
        %1107 = vmatprep.subr.bf16.mxu0 0
        %1108 = vmatpush1.bf16.xpose.msra.mxu0 %v1091
        %1109 = vmatprep.subr.bf16.mxu0 0
        %1110 = vmatpush2.bf16.xpose.msra.mxu0 0
        %1111 = vmatprep.subr.bf16.mxu0 0
        %1112 = vmatpush2.bf16.xpose.msra.mxu0 0
        %1113 = vmatprep.subr.bf16.mxu0 0
        %1114 = vmatpush2.bf16.xpose.msra.mxu0 0
        %1115 = vmatprep.subr.bf16.mxu0 0
        %1116 = vmatpush2.bf16.xpose.msra.mxu0 0
        %1117 = vmatprep.subr.bf16.mxu0 0
        %1118 = vmatpush2.bf16.xpose.msra.mxu0 0
        %1119 = vmatprep.subr.bf16.mxu0 0
        %1120 = vmatpush2.bf16.xpose.msra.mxu0 0
        %1121 = vmatprep.subr.bf16.mxu0 0
        %1122 = vmatpush2.bf16.xpose.msra.mxu0 0
        %1123 = vmatprep.subr.bf16.mxu0 0
        %1124 = vmatpush2.bf16.xpose.msra.mxu0 0
        %1125 = vmatprep.mubr.bf16.mxu0 0
        %1126 = vmatmul.mubr.bf16.gmra.mxu0 %v1085
        %v1127 = vpop.f32.mrf.mxu0
        %v1128 = vadd.f32 0.0, %v1127
        %v1129 = vpop.f32.mrf.mxu0
        %v1130 = vpop.f32.mrf.mxu0
        %v1131 = vadd.f32 0.0, %v1130
        %v1132 = vpop.f32.mrf.mxu0
        %1133 = vmatprep.mubr.bf16.mxu0 0
        %1134 = vmatmul.mubr.bf16.gmra.mxu0 %v1088
        %v1135 = vpop.f32.mrf.mxu0
        %v1136 = vadd.f32 0.0, %v1135
        %v1137 = vpop.f32.mrf.mxu0
        %v1138 = vpop.f32.mrf.mxu0
        %v1139 = vadd.f32 0.0, %v1138
        %v1140 = vpop.f32.mrf.mxu0
        %1141 = vdwg.mxu0
        %v1142 = vlaneseq
        %v1143 = vshrl.u32 %v1142, 7
        %v1144 = vlaneseq
        %v1145 = vand.u32 %v1144, 127
        %1146 = vset.pattern.permute.xlu0 0
        %1147 = vperm.xlu0 %1146, %v1143
        %v1148 = vpop.permute.xlu0 %1147
        %vm1149 = vcmp.gt.s32.totalorder %v1145, %v1148
        %v1150 = vsel %vm1149, -3.4028235e+38, %v1128
        %v1151 = vsel %vm1149, -3.4028235e+38, %v1131
        %v1152 = vsel %vm1149, -3.4028235e+38, %v1136
        %v1153 = vsel %vm1149, -3.4028235e+38, %v1139
        %v1154 = vsel %vm1083, %v1150, -inf
        %1155 = vmax.xlane.f32.xlu0 %v1154
        %v1156 = vpop.xlane.xlu0 %1155
        %v1157 = vsel %vm1083, %v1151, -inf
        %1158 = vmax.xlane.f32.xlu0 %v1157
        %v1159 = vpop.xlane.xlu0 %1158
        %v1160 = vsel %vm1083, %v1152, -inf
        %1161 = vmax.xlane.f32.xlu0 %v1160
        %v1162 = vpop.xlane.xlu0 %1161
        %v1163 = vsel %vm1083, %v1153, -inf
        %1164 = vmax.xlane.f32.xlu0 %v1163
        %v1165 = vpop.xlane.xlu0 %1164
        %v1166 = vsub.f32 %v1150, %v1156
        %v1167 = vsub.f32 %v1151, %v1159
        %v1168 = vsub.f32 %v1152, %v1162
        %v1169 = vsub.f32 %v1153, %v1165
        %v1170 = vmul.f32 %v1166, 1.442695
        %v1171 = vpow.pop %v1170
        %v1172 = vmul.f32 %v1167, 1.442695
        %v1173 = vpow.pop %v1172
        %v1174 = vmul.f32 %v1168, 1.442695
        %v1175 = vpow.pop %v1174
        %v1176 = vmul.f32 %v1169, 1.442695
        %v1177 = vpow.pop %v1176
        %v1178 = vsel %vm1083, %v1171, 0.0
        %1179 = vadd.xlane.f32.xlu0 %v1178
        %v1180 = vpop.xlane.xlu0 %1179
        %v1181 = vsel %vm1083, %v1173, 0.0
        %1182 = vadd.xlane.f32.xlu0 %v1181
        %v1183 = vpop.xlane.xlu0 %1182
        %v1184 = vsel %vm1083, %v1175, 0.0
        %1185 = vadd.xlane.f32.xlu0 %v1184
        %v1186 = vpop.xlane.xlu0 %1185
        %v1187 = vsel %vm1083, %v1177, 0.0
        %1188 = vadd.xlane.f32.xlu0 %v1187
        %v1189 = vpop.xlane.xlu0 %1188
        %v1190 = vrcp.pop %v1180
        %v1191 = vrcp.pop %v1183
        %v1192 = vrcp.pop %v1186
        %v1193 = vrcp.pop %v1189
        %v1194 = vmul.f32 %v1171, %v1190
        %v1195 = vmul.f32 %v1173, %v1191
        %v1196 = vmul.f32 %v1175, %v1192
        %v1197 = vmul.f32 %v1177, %v1193
        %v1198 = vpack.c.bf16 %v1195, %v1194
        %v1199 = vpack.c.bf16 %v1197, %v1196
        %v1200 = vpack.c.bf16 %v1063, %v1063
        %1202 = vrot.lane.b32.xlu0 %v1200, 120
        %v1203 = vpop.permute.xlu0 %1202
        %v1205 = vsel %vm1083, %v1198, 0
        %v1208 = vsel %vm1083, %v1199, 0
        %vm1210 = vcmask 1043456
        %v1212 = vsel %vm1210, %v1203, 0
        %1214 = vmatprep.subr.bf16.mxu0 0
        %1215 = vmatpush1.bf16.msra.mxu0 0
        %1216 = vmatprep.subr.bf16.mxu0 0
        %1217 = vmatpush1.bf16.msra.mxu0 0
        %1218 = vmatprep.subr.bf16.mxu0 0
        %1219 = vmatpush1.bf16.msra.mxu0 0
        %1220 = vmatprep.subr.bf16.mxu0 0
        %1221 = vmatpush1.bf16.msra.mxu0 0
        %1222 = vmatprep.subr.bf16.mxu0 0
        %1223 = vmatpush1.bf16.msra.mxu0 0
        %1224 = vmatprep.subr.bf16.mxu0 0
        %1225 = vmatpush1.bf16.msra.mxu0 0
        %1226 = vmatprep.subr.bf16.mxu0 0
        %1227 = vmatpush1.bf16.msra.mxu0 0
        %1228 = vmatprep.subr.bf16.mxu0 0
        %1229 = vmatpush1.bf16.msra.mxu0 %v1212
        %1230 = vmatprep.subr.bf16.mxu0 0
        %1231 = vmatpush2.bf16.msra.mxu0 0
        %1232 = vmatprep.subr.bf16.mxu0 0
        %1233 = vmatpush2.bf16.msra.mxu0 0
        %1234 = vmatprep.subr.bf16.mxu0 0
        %1235 = vmatpush2.bf16.msra.mxu0 0
        %1236 = vmatprep.subr.bf16.mxu0 0
        %1237 = vmatpush2.bf16.msra.mxu0 0
        %1238 = vmatprep.subr.bf16.mxu0 0
        %1239 = vmatpush2.bf16.msra.mxu0 0
        %1240 = vmatprep.subr.bf16.mxu0 0
        %1241 = vmatpush2.bf16.msra.mxu0 0
        %1242 = vmatprep.subr.bf16.mxu0 0
        %1243 = vmatpush2.bf16.msra.mxu0 0
        %1244 = vmatprep.subr.bf16.mxu0 0
        %1245 = vmatpush2.bf16.msra.mxu0 0
        %1246 = vmatprep.mubr.bf16.mxu0 0
        %1247 = vmatmul.mubr.bf16.gmra.mxu0 %v1205
        %v1248 = vpop.f32.mrf.mxu0
        %v1249 = vadd.f32 0.0, %v1248
        %v1250 = vpop.f32.mrf.mxu0
        %v1251 = vpop.f32.mrf.mxu0
        %v1252 = vadd.f32 0.0, %v1251
        %v1253 = vpop.f32.mrf.mxu0
        %1254 = vmatprep.mubr.bf16.mxu0 0
        %1255 = vmatmul.mubr.bf16.gmra.mxu0 %v1208
        %v1256 = vpop.f32.mrf.mxu0
        %v1257 = vadd.f32 0.0, %v1256
        %v1258 = vpop.f32.mrf.mxu0
        %v1259 = vpop.f32.mrf.mxu0
        %v1260 = vadd.f32 0.0, %v1259
        %v1261 = vpop.f32.mrf.mxu0
        %1262 = vdwg.mxu0
        %1264 = vrot.lane.b32.xlu0 %v1252, 8
        %v1265 = vpop.permute.xlu0 %1264
        %1268 = vrot.lane.b32.xlu0 %v1257, 16
        %v1269 = vpop.permute.xlu0 %1268
        %1272 = vrot.lane.b32.xlu0 %v1260, 24
        %v1273 = vpop.permute.xlu0 %1272
        %v1275 = vsel %vm1083, %v1249, %v1265
        %vm1276 = vcmask 130048
        %v1277 = vsel %vm1276, %v1275, %v1269
        %vm1278 = vcmask 195584
        %v1279 = vsel %vm1278, %v1277, %v1273
        %v1280 = vpack.c.bf16 %v1279, %v1279
        %v1281 = vld [vmem:[%s794] sm:$0xf]
        %v1282 = vld [vmem:[%s794 + $0x4] sm:$0xf]
        %v1283 = vld [vmem:[%s794 + $0x8] sm:$0xf]
        %v1284 = vld [vmem:[%s794 + $0xc] sm:$0xf]
        %v1289 = vunpack.c.l.b16 %v1281
        %v1290 = vunpack.c.l.b16 %v1282
        %v1291 = vunpack.c.l.b16 %v1283
        %v1292 = vunpack.c.l.b16 %v1284
        %v1293 = vpack.c.b16 %v1290, %v1289
        %v1294 = vpack.c.b16 %v1292, %v1291
        %v1298 = vsel %vm892, %v1280, 0
        %1300 = vmatprep.subr.bf16.mxu0 0
        %1301 = vmatpush1.bf16.msra.mxu0 0
        %1302 = vmatprep.subr.bf16.mxu0 0
        %1303 = vmatpush1.bf16.msra.mxu0 0
        %1304 = vmatprep.subr.bf16.mxu0 0
        %1305 = vmatpush1.bf16.msra.mxu0 0
        %1306 = vmatprep.subr.bf16.mxu0 0
        %1307 = vmatpush1.bf16.msra.mxu0 0
        %1308 = vmatprep.subr.bf16.mxu0 0
        %1309 = vmatpush1.bf16.msra.mxu0 0
        %1310 = vmatprep.subr.bf16.mxu0 0
        %1311 = vmatpush1.bf16.msra.mxu0 0
        %1312 = vmatprep.subr.bf16.mxu0 0
        %1313 = vmatpush1.bf16.msra.mxu0 %v1294
        %1314 = vmatprep.subr.bf16.mxu0 0
        %1315 = vmatpush1.bf16.msra.mxu0 %v1293
        %1316 = vmatprep.subr.bf16.mxu0 0
        %1317 = vmatpush2.bf16.msra.mxu0 0
        %1318 = vmatprep.subr.bf16.mxu0 0
        %1319 = vmatpush2.bf16.msra.mxu0 0
        %1320 = vmatprep.subr.bf16.mxu0 0
        %1321 = vmatpush2.bf16.msra.mxu0 0
        %1322 = vmatprep.subr.bf16.mxu0 0
        %1323 = vmatpush2.bf16.msra.mxu0 0
        %1324 = vmatprep.subr.bf16.mxu0 0
        %1325 = vmatpush2.bf16.msra.mxu0 0
        %1326 = vmatprep.subr.bf16.mxu0 0
        %1327 = vmatpush2.bf16.msra.mxu0 0
        %1328 = vmatprep.subr.bf16.mxu0 0
        %1329 = vmatpush2.bf16.msra.mxu0 0
        %1330 = vmatprep.subr.bf16.mxu0 0
        %1331 = vmatpush2.bf16.msra.mxu0 0
        %1332 = vmatprep.mubr.bf16.mxu0 0
        %1333 = vmatmul.mubr.bf16.gmra.mxu0 %v1298
        %v1334 = vpop.f32.mrf.mxu0
        %v1335 = vadd.f32 0.0, %v1334
        %v1336 = vpop.f32.mrf.mxu0
        %v1337 = vpop.f32.mrf.mxu0
        %v1338 = vpop.f32.mrf.mxu0
        %1339 = vdwg.mxu0
        %v1340 = vsel %vm892, %v1335, 0.0
        %1341 = vadd.xlane.f32.xlu0 %v1340
        %v1342 = vpop.xlane.xlu0 %1341
        %v1343 = vmul.f32 %v1342, %v896
        %v1344 = vsub.f32 %v1335, %v1343
        %v1345 = vmul.f32 %v1344, %v1344
        %v1346 = vsel %vm892, %v1345, 0.0
        %1347 = vadd.xlane.f32.xlu0 %v1346
        %v1348 = vpop.xlane.xlu0 %1347
        %v1349 = vmul.f32 %v1348, %v896
        %v1350 = vadd.f32 %v1349, 1e-05
        %v1351 = vrsqrt.pop %v1350
        %v1352 = vmul.f32 %v1344, %v1351
        %v1353 = vld [vmem:[%s797] sm:$0x1]
        %v1355 = vlaneseq
        %v1356 = vshrl.u32 %v1355, 7
        %v1357 = vsub.s32 0, %v1356
        %v1358 = vrot.slane %v1353, %v1357
        %v1360 = vmul.f32 %v1352, %v1358
        %v1361 = vld [vmem:[%s800] sm:$0x1]
        %v1363 = vlaneseq
        %v1364 = vshrl.u32 %v1363, 7
        %v1365 = vsub.s32 0, %v1364
        %v1366 = vrot.slane %v1361, %v1365
        %v1368 = vadd.f32 %v1360, %v1366
        %v1369 = vadd.f32 %v891, %v1368
        %v1370 = vsel %vm892, %v1369, 0.0
        %1371 = vadd.xlane.f32.xlu0 %v1370
        %v1372 = vpop.xlane.xlu0 %1371
        %v1373 = vmul.f32 %v1372, %v896
        %v1374 = vsub.f32 %v1369, %v1373
        %v1375 = vmul.f32 %v1374, %v1374
        %v1376 = vsel %vm892, %v1375, 0.0
        %1377 = vadd.xlane.f32.xlu0 %v1376
        %v1378 = vpop.xlane.xlu0 %1377
        %v1379 = vmul.f32 %v1378, %v896
        %v1380 = vadd.f32 %v1379, 1e-05
        %v1381 = vrsqrt.pop %v1380
        %v1382 = vmul.f32 %v1374, %v1381
        %v1383 = vld [vmem:[%s803] sm:$0x1]
        %v1385 = vlaneseq
        %v1386 = vshrl.u32 %v1385, 7
        %v1387 = vsub.s32 0, %v1386
        %v1388 = vrot.slane %v1383, %v1387
        %v1390 = vmul.f32 %v1382, %v1388
        %v1391 = vld [vmem:[%s806] sm:$0x1]
        %v1393 = vlaneseq
        %v1394 = vshrl.u32 %v1393, 7
        %v1395 = vsub.s32 0, %v1394
        %v1396 = vrot.slane %v1391, %v1395
        %v1398 = vadd.f32 %v1390, %v1396
        %v1399 = vpack.c.bf16 %v1398, %v1398
        %v1400 = vld [vmem:[%s811] sm:$0xf]
        %v1401 = vld [vmem:[%s811 + $0x4] sm:$0xf]
        %v1402 = vld [vmem:[%s811 + $0x8] sm:$0xf]
        %v1403 = vld [vmem:[%s811 + $0xc] sm:$0xf]
        %v1404 = vld [vmem:[%s814] sm:$0x1]
        %v1406 = vlaneseq
        %v1407 = vshrl.u32 %v1406, 7
        %v1408 = vsub.s32 0, %v1407
        %v1409 = vrot.slane %v1404, %v1408
        %v1415 = vunpack.c.l.b16 %v1400
        %v1416 = vunpack.c.l.b16 %v1401
        %v1417 = vunpack.c.l.b16 %v1402
        %v1418 = vunpack.c.l.b16 %v1403
        %v1419 = vpack.c.b16 %v1416, %v1415
        %v1420 = vpack.c.b16 %v1418, %v1417
        %v1424 = vsel %vm892, %v1399, 0
        %1426 = vmatprep.subr.bf16.mxu0 0
        %1427 = vmatpush1.bf16.msra.mxu0 0
        %1428 = vmatprep.subr.bf16.mxu0 0
        %1429 = vmatpush1.bf16.msra.mxu0 0
        %1430 = vmatprep.subr.bf16.mxu0 0
        %1431 = vmatpush1.bf16.msra.mxu0 0
        %1432 = vmatprep.subr.bf16.mxu0 0
        %1433 = vmatpush1.bf16.msra.mxu0 0
        %1434 = vmatprep.subr.bf16.mxu0 0
        %1435 = vmatpush1.bf16.msra.mxu0 0
        %1436 = vmatprep.subr.bf16.mxu0 0
        %1437 = vmatpush1.bf16.msra.mxu0 0
        %1438 = vmatprep.subr.bf16.mxu0 0
        %1439 = vmatpush1.bf16.msra.mxu0 %v1420
        %1440 = vmatprep.subr.bf16.mxu0 0
        %1441 = vmatpush1.bf16.msra.mxu0 %v1419
        %1442 = vmatprep.subr.bf16.mxu0 0
        %1443 = vmatpush2.bf16.msra.mxu0 0
        %1444 = vmatprep.subr.bf16.mxu0 0
        %1445 = vmatpush2.bf16.msra.mxu0 0
        %1446 = vmatprep.subr.bf16.mxu0 0
        %1447 = vmatpush2.bf16.msra.mxu0 0
        %1448 = vmatprep.subr.bf16.mxu0 0
        %1449 = vmatpush2.bf16.msra.mxu0 0
        %1450 = vmatprep.subr.bf16.mxu0 0
        %1451 = vmatpush2.bf16.msra.mxu0 0
        %1452 = vmatprep.subr.bf16.mxu0 0
        %1453 = vmatpush2.bf16.msra.mxu0 0
        %1454 = vmatprep.subr.bf16.mxu0 0
        %1455 = vmatpush2.bf16.msra.mxu0 0
        %1456 = vmatprep.subr.bf16.mxu0 0
        %1457 = vmatpush2.bf16.msra.mxu0 0
        %1458 = vmatprep.mubr.bf16.mxu0 0
        %1459 = vmatmul.mubr.bf16.gmra.mxu0 %v1424
        %v1460 = vpop.f32.mrf.mxu0
        %v1461 = vadd.f32 %v1409, %v1460
        %v1462 = vpop.f32.mrf.mxu0
        %v1463 = vpop.f32.mrf.mxu0
        %v1464 = vpop.f32.mrf.mxu0
        %1465 = vdwg.mxu0
        %v1466 = vmul.f32 %v1461, 0.5
        %v1467 = vmul.f32 %v1461, 0.70710677
        %v1468 = vand.u32 2147483647, %v1467
        %v1469 = vmul.f32 %v1468, 0.3275911
        %v1470 = vadd.f32 %v1469, 1.0
        %v1471 = vrcp.pop %v1470
        %v1472 = vmul.f32 %v1471, 1.0614054
        %v1473 = vadd.f32 %v1472, -1.4531521
        %v1474 = vmul.f32 %v1473, %v1471
        %v1475 = vadd.f32 %v1474, 1.4214138
        %v1476 = vmul.f32 %v1475, %v1471
        %v1477 = vadd.f32 %v1476, -0.28449672
        %v1478 = vmul.f32 %v1477, %v1471
        %v1479 = vadd.f32 %v1478, 0.2548296
        %v1480 = vmul.f32 %v1479, %v1471
        %v1481 = vsub.f32 0.0, %v1468
        %v1482 = vmul.f32 %v1481, %v1468
        %v1483 = vmul.f32 %v1482, 1.442695
        %v1484 = vpow.pop %v1483
        %v1485 = vmul.f32 %v1480, %v1484
        %v1486 = vsub.f32 1.0, %v1485
        %vm1487 = vcmp.ge.f32.partialorder %v1467, 0.0
        %v1488 = vsub.f32 0.0, %v1486
        %v1489 = vsel %vm1487, %v1486, %v1488
        %v1490 = vadd.f32 %v1489, 1.0
        %v1491 = vmul.f32 %v1466, %v1490
        %v1492 = vpack.c.bf16 %v1491, %v1491
        %v1493 = vld [vmem:[%s819] sm:$0xf]
        %v1494 = vld [vmem:[%s819 + $0x4] sm:$0xf]
        %v1495 = vld [vmem:[%s819 + $0x8] sm:$0xf]
        %v1496 = vld [vmem:[%s819 + $0xc] sm:$0xf]
        %v1497 = vld [vmem:[%s819 + $0x10] sm:$0xf]
        %v1498 = vld [vmem:[%s819 + $0x14] sm:$0xf]
        %v1499 = vld [vmem:[%s819 + $0x18] sm:$0xf]
        %v1500 = vld [vmem:[%s819 + $0x1c] sm:$0xf]
        %v1501 = vld [vmem:[%s819 + $0x20] sm:$0xf]
        %v1502 = vld [vmem:[%s819 + $0x24] sm:$0xf]
        %v1503 = vld [vmem:[%s819 + $0x28] sm:$0xf]
        %v1504 = vld [vmem:[%s819 + $0x2c] sm:$0xf]
        %v1505 = vld [vmem:[%s819 + $0x30] sm:$0xf]
        %v1506 = vld [vmem:[%s819 + $0x34] sm:$0xf]
        %v1507 = vld [vmem:[%s819 + $0x38] sm:$0xf]
        %v1508 = vld [vmem:[%s819 + $0x3c] sm:$0xf]
        %v1509 = vld [vmem:[%s822] sm:$0x1]
        %v1511 = vlaneseq
        %v1512 = vshrl.u32 %v1511, 7
        %v1513 = vsub.s32 0, %v1512
        %v1514 = vrot.slane %v1509, %v1513
        %v1532 = vunpack.c.l.b16 %v1493
        %v1533 = vunpack.c.l.b16 %v1494
        %v1534 = vunpack.c.l.b16 %v1495
        %v1535 = vunpack.c.l.b16 %v1496
        %v1536 = vunpack.c.l.b16 %v1497
        %v1537 = vunpack.c.l.b16 %v1498
        %v1538 = vunpack.c.l.b16 %v1499
        %v1539 = vunpack.c.l.b16 %v1500
        %v1540 = vunpack.c.l.b16 %v1501
        %v1541 = vunpack.c.l.b16 %v1502
        %v1542 = vunpack.c.l.b16 %v1503
        %v1543 = vunpack.c.l.b16 %v1504
        %v1544 = vunpack.c.l.b16 %v1505
        %v1545 = vunpack.c.l.b16 %v1506
        %v1546 = vunpack.c.l.b16 %v1507
        %v1547 = vunpack.c.l.b16 %v1508
        %v1548 = vpack.c.b16 %v1533, %v1532
        %v1549 = vpack.c.b16 %v1535, %v1534
        %v1550 = vpack.c.b16 %v1537, %v1536
        %v1551 = vpack.c.b16 %v1539, %v1538
        %v1552 = vpack.c.b16 %v1541, %v1540
        %v1553 = vpack.c.b16 %v1543, %v1542
        %v1554 = vpack.c.b16 %v1545, %v1544
        %v1555 = vpack.c.b16 %v1547, %v1546
        %1564 = vmatprep.subr.bf16.mxu0 0
        %1565 = vmatpush1.bf16.msra.mxu0 %v1555
        %1566 = vmatprep.subr.bf16.mxu0 0
        %1567 = vmatpush1.bf16.msra.mxu0 %v1554
        %1568 = vmatprep.subr.bf16.mxu0 0
        %1569 = vmatpush1.bf16.msra.mxu0 %v1553
        %1570 = vmatprep.subr.bf16.mxu0 0
        %1571 = vmatpush1.bf16.msra.mxu0 %v1552
        %1572 = vmatprep.subr.bf16.mxu0 0
        %1573 = vmatpush1.bf16.msra.mxu0 %v1551
        %1574 = vmatprep.subr.bf16.mxu0 0
        %1575 = vmatpush1.bf16.msra.mxu0 %v1550
        %1576 = vmatprep.subr.bf16.mxu0 0
        %1577 = vmatpush1.bf16.msra.mxu0 %v1549
        %1578 = vmatprep.subr.bf16.mxu0 0
        %1579 = vmatpush1.bf16.msra.mxu0 %v1548
        %1580 = vmatprep.subr.bf16.mxu0 0
        %1581 = vmatpush2.bf16.msra.mxu0 0
        %1582 = vmatprep.subr.bf16.mxu0 0
        %1583 = vmatpush2.bf16.msra.mxu0 0
        %1584 = vmatprep.subr.bf16.mxu0 0
        %1585 = vmatpush2.bf16.msra.mxu0 0
        %1586 = vmatprep.subr.bf16.mxu0 0
        %1587 = vmatpush2.bf16.msra.mxu0 0
        %1588 = vmatprep.subr.bf16.mxu0 0
        %1589 = vmatpush2.bf16.msra.mxu0 0
        %1590 = vmatprep.subr.bf16.mxu0 0
        %1591 = vmatpush2.bf16.msra.mxu0 0
        %1592 = vmatprep.subr.bf16.mxu0 0
        %1593 = vmatpush2.bf16.msra.mxu0 0
        %1594 = vmatprep.subr.bf16.mxu0 0
        %1595 = vmatpush2.bf16.msra.mxu0 0
        %1596 = vmatprep.mubr.bf16.mxu0 0
        %1597 = vmatmul.mubr.bf16.gmra.mxu0 %v1492
        %v1598 = vpop.f32.mrf.mxu0
        %v1599 = vadd.f32 %v1514, %v1598
        %v1600 = vpop.f32.mrf.mxu0
        %v1601 = vpop.f32.mrf.mxu0
        %v1602 = vpop.f32.mrf.mxu0
        %1603 = vdwg.mxu0
        %v1604 = vadd.f32 %v1369, %v1599
        %1605 = vst.msk [vmem:[#allocation2] sm:$0xff] %vm892, %v1604
        %p1606 = scmp.eq.s32.totalorder %s37, 1
        // Predicated region
        $region97: #{tpu_custom_call.1} parent=91 // pred_check
          %p1607 = pneg %p1606
        $region98: #{tpu_custom_call.1} parent=91 // pred_check_branch
          %1609 = sbr.rel (%p1607) target = $region100
        $region99: #{tpu_custom_call.1} parent=91 // pred_region
          %v1610 = vld [vmem:[#allocation2] sm:$0xff]
          %1611 = vst.msk [vmem:[%s763] sm:$0xff] %vm892, %v1610
        $region100: #{tpu_custom_call.1} parent=91 // pred_fallthru
          _
        %s1612 = sand.u32 %s510, 1
        %s1613 = scalar_lea.sflag [#allocation4], %s1612
        %s1614 = sand.u32 %s510, 1
        %s1615 = smul.addr %s1614, 8
        %s1616 = scalar_lea.vmem [#allocation3], %s1615
        // Predicated region
        $region101: #{tpu_custom_call.1} parent=91 // pred_check
          %p1617 = pneg %p520
        $region102: #{tpu_custom_call.1} parent=91 // pred_check_branch
          %1619 = sbr.rel (%p1617) target = $region104
        $region103: #{tpu_custom_call.1} parent=91 // pred_region
          %s1621 = ssub.s32 128, 128
          %1622 = vsyncadd %s1613, %s1621
          %s1623 = smul.addr %s36, 128
          %s1624 = scalar_lea.hbm %s18, %s1623
          %s1626 = sshll.u32 %s1616, 4
          %s1627 = int_to_ptr.vmem [resolvable:$true] %s1626
          %1629 = dma.vmem_to_hbm [thread:$0]  %s1627, 128, %s1624, %s1613
        $region104: #{tpu_custom_call.1} parent=91 // pred_fallthru
          _
      $region92: #{tpu_custom_call.1} parent=5 // pred_fallthru
        _
      %p1630 = scmp.le.s32.totalorder 2, %s27
      // Predicated region
      $region105: #{tpu_custom_call.1} parent=5 // pred_check
        %p1631 = pneg %p1630
      $region106: #{tpu_custom_call.1} parent=5 // pred_check_branch
        %1633 = sbr.rel (%p1631) target = $region108
      $region107: #{tpu_custom_call.1} parent=5 // pred_region
        %s1634 = ssub.s32 %s27, 2
        // Predicated region
        $region109: #{tpu_custom_call.1} parent=107 // pred_check
          %p1635 = pneg %p526
        $region110: #{tpu_custom_call.1} parent=107 // pred_check_branch
          %1637 = sbr.rel (%p1635) target = $region112
        $region111: #{tpu_custom_call.1} parent=107 // pred_region
          %s1638 = sand.u32 %s511, 1
          %s1639 = scalar_lea.sflag [#allocation4], %s1638
          %s1640 = sand.u32 %s511, 1
          %s1641 = smul.addr %s1640, 8
          %s1642 = scalar_lea.vmem [#allocation3], %s1641
          %1643 = dma.done %s1639, 128
        $region112: #{tpu_custom_call.1} parent=107 // pred_fallthru
          _
      $region108: #{tpu_custom_call.1} parent=5 // pred_fallthru
        _
    $region6: #{tpu_custom_call.1} parent=1 // loop_footer
      %s31 = sadd.s32 1, %s27
    $region7: #{tpu_custom_call.1} parent=1 // loop_footer_branch
      %26 = sbr.rel target = $region3
    $region8: #{tpu_custom_call.1} parent=1 // loop_exit
      _
    %1644 = vsyncpa [#allocation4], 1
    %s1645 = scalar_lea.sflag [#allocation4], 1
    %1646 = vsyncpa %s1645, 1

</llo_original>
